<compile_context>
chip_gen: v6e
topology: v6e:2x2x1
jax: 0.10.0
libtpu: 0.0.40
codegen_flags: <defaults>
</compile_context>

<pallas_src>
import functools

import jax
import jax.numpy as jnp
from jax import lax
from jax.experimental import pallas as pl
from jax.experimental.pallas import tpu as pltpu

EPS = 1e-5
LANE = 128
SUBLANE = 8
MIN_TILE_M = 16        # keep row tiles multiples of 16 (bf16 sublane packing)
MAX_TILE_M = 2048


def _round_up(x, m):
    return (x + m - 1) // m * m


def _vmem_capacity_bytes():
    """Per-core VMEM capacity queried from the chip; conservative fallback."""
    try:
        cap = int(pltpu.get_tpu_info().vmem_capacity_bytes)
        if cap > 0:
            return cap
    except Exception:
        pass
    return 64 * 1024 * 1024            # v7x-sized fallback (safe everywhere)


VMEM_CAP = _vmem_capacity_bytes()
# Budget used for sizing the streamed (double-buffered) row tiles.
VMEM_TILE_BUDGET = int(VMEM_CAP * 0.55)
# Explicit Mosaic scoped-VMEM limit (headroom left for internal scratch).
VMEM_LIMIT_BYTES = min(int(VMEM_CAP * 0.8), 112 * 1024 * 1024)


def _pick_tile_m(M, bytes_per_row, budget):
    """Largest power-of-two row tile (<= MAX_TILE_M) whose double-buffered
    streamed working set fits the (resident-adjusted) VMEM budget."""
    tile = MAX_TILE_M
    while tile > MIN_TILE_M and 2 * tile * bytes_per_row > budget:
        tile //= 2
    return max(MIN_TILE_M, min(tile, _round_up(M, MIN_TILE_M)))


# ----------------------------- Pallas kernels ------------------------------ #

def _conv_stats_kernel(p_ref, w_ref, y_ref, s_ref, q_ref):
    """y = patches @ w (bf16 operands, f32 MXU accumulation).  The conv output
    is stored bf16; per-tile per-channel sum / sum-of-squares partials are
    taken from the f32 accumulator (before the cast) and written to this
    tile's own (1, Cp) slot so the grid stays fully "parallel"."""
    y = jnp.dot(p_ref[...], w_ref[...], preferred_element_type=jnp.float32)
    y_ref[...] = y.astype(y_ref.dtype)
    s_ref[0] = jnp.sum(y, axis=0, keepdims=True)
    q_ref[0] = jnp.sum(y * y, axis=0, keepdims=True)


def _conv_pair_stats_kernel(p1_ref, w1_ref, ps_ref, ws_ref,
                            y1_ref, ys_ref, s1_ref, q1_ref, ss_ref, qs_ref):
    """conv1 matmul + fused 1x1 projection-shortcut matmul, each with per-tile
    per-channel sum / sum-of-squares partials for their BatchNorms."""
    y1 = jnp.dot(p1_ref[...], w1_ref[...], preferred_element_type=jnp.float32)
    ys = jnp.dot(ps_ref[...], ws_ref[...], preferred_element_type=jnp.float32)
    y1_ref[...] = y1.astype(y1_ref.dtype)
    ys_ref[...] = ys.astype(ys_ref.dtype)
    s1_ref[0] = jnp.sum(y1, axis=0, keepdims=True)
    q1_ref[0] = jnp.sum(y1 * y1, axis=0, keepdims=True)
    ss_ref[0] = jnp.sum(ys, axis=0, keepdims=True)
    qs_ref[0] = jnp.sum(ys * ys, axis=0, keepdims=True)


def _bn_relu_kernel(y_ref, sc_ref, sh_ref, o_ref):
    """o = relu(y * scale + shift) from precomputed per-channel scale/shift.
    y arrives bf16, math is f32, output cast to bf16 (feeds conv2's matmul)."""
    y = y_ref[...].astype(jnp.float32)
    o_ref[...] = jnp.maximum(y * sc_ref[...] + sh_ref[...],
                             0.0).astype(o_ref.dtype)


def _bn_relu_residual_kernel(y_ref, sc2_ref, sh2_ref, r_ref, scs_ref, shs_ref,
                             o_ref):
    """out = relu(relu(y*scale2 + shift2) + (r*scale_s + shift_s))."""
    main = jnp.maximum(
        y_ref[...].astype(jnp.float32) * sc2_ref[...] + sh2_ref[...], 0.0)
    short = r_ref[...].astype(jnp.float32) * scs_ref[...] + shs_ref[...]
    o_ref[...] = jnp.maximum(main + short, 0.0).astype(o_ref.dtype)


# ----------------------------- pallas_call glue ----------------------------- #

def _row_spec(tile_m, cols):
    return pl.BlockSpec((tile_m, cols), lambda i: (i, 0))


def _resident_spec(rows, cols):
    return pl.BlockSpec((rows, cols), lambda i: (0, 0))


def _stats_spec(cols):
    # Per-tile (1, Cp) partial-sum slot of a (num_tiles, 1, Cp) output.
    return pl.BlockSpec((1, 1, cols), lambda i: (i, 0, 0))


def _cparams():
    return pltpu.CompilerParams(dimension_semantics=("parallel",),
                                vmem_limit_bytes=VMEM_LIMIT_BYTES)


def conv_stats(patches, w, tile_m, y_dtype):
    M_pad, K = patches.shape
    Cp = w.shape[1]
    nt = M_pad // tile_m
    return pl.pallas_call(
        _conv_stats_kernel,
        out_shape=(jax.ShapeDtypeStruct((M_pad, Cp), y_dtype),
                   jax.ShapeDtypeStruct((nt, 1, Cp), jnp.float32),
                   jax.ShapeDtypeStruct((nt, 1, Cp), jnp.float32)),
        grid=(nt,),
        in_specs=[_row_spec(tile_m, K), _resident_spec(K, Cp)],
        out_specs=(_row_spec(tile_m, Cp), _stats_spec(Cp), _stats_spec(Cp)),
        compiler_params=_cparams(),
    )(patches, w)


def conv_pair_stats(p1, w1, ps, ws, tile_m, y_dtype):
    M_pad, K1 = p1.shape
    Cin = ps.shape[1]
    Cp = w1.shape[1]
    nt = M_pad // tile_m
    return pl.pallas_call(
        _conv_pair_stats_kernel,
        out_shape=(jax.ShapeDtypeStruct((M_pad, Cp), y_dtype),
                   jax.ShapeDtypeStruct((M_pad, Cp), y_dtype),
                   jax.ShapeDtypeStruct((nt, 1, Cp), jnp.float32),
                   jax.ShapeDtypeStruct((nt, 1, Cp), jnp.float32),
                   jax.ShapeDtypeStruct((nt, 1, Cp), jnp.float32),
                   jax.ShapeDtypeStruct((nt, 1, Cp), jnp.float32)),
        grid=(nt,),
        in_specs=[_row_spec(tile_m, K1), _resident_spec(K1, Cp),
                  _row_spec(tile_m, Cin), _resident_spec(Cin, Cp)],
        out_specs=(_row_spec(tile_m, Cp), _row_spec(tile_m, Cp),
                   _stats_spec(Cp), _stats_spec(Cp),
                   _stats_spec(Cp), _stats_spec(Cp)),
        compiler_params=_cparams(),
    )(p1, w1, ps, ws)


def bn_relu(y, scale, shift, tile_m, out_dtype):
    M_pad, Cp = y.shape
    return pl.pallas_call(
        _bn_relu_kernel,
        out_shape=jax.ShapeDtypeStruct((M_pad, Cp), out_dtype),
        grid=(M_pad // tile_m,),
        in_specs=[_row_spec(tile_m, Cp),
                  _resident_spec(1, Cp), _resident_spec(1, Cp)],
        out_specs=_row_spec(tile_m, Cp),
        compiler_params=_cparams(),
    )(y, scale, shift)


def bn_relu_residual(y, scale2, shift2, res, scale_s, shift_s, tile_m):
    M_pad, Cp = y.shape
    return pl.pallas_call(
        _bn_relu_residual_kernel,
        out_shape=jax.ShapeDtypeStruct((M_pad, Cp), jnp.float32),
        grid=(M_pad // tile_m,),
        in_specs=[_row_spec(tile_m, Cp),
                  _resident_spec(1, Cp), _resident_spec(1, Cp),
                  _row_spec(tile_m, Cp),
                  _resident_spec(1, Cp), _resident_spec(1, Cp)],
        out_specs=_row_spec(tile_m, Cp),
        compiler_params=_cparams(),
    )(y, scale2, shift2, res, scale_s, shift_s)


# --------------------------- wrapper-side helpers ---------------------------- #

def im2col(x_nhwc, kh, kw, stride, pad):
    """Patch extraction (pure data movement, plain JAX; input already bf16).
    Rows ordered (n, ho, wo); columns ordered (ki, kj, cin)."""
    N, H, W, C = x_nhwc.shape
    xp = jnp.pad(x_nhwc, ((0, 0), (pad, pad), (pad, pad), (0, 0)))
    Ho = (H + 2 * pad - kh) // stride + 1
    Wo = (W + 2 * pad - kw) // stride + 1
    cols = []
    for i in range(kh):
        for j in range(kw):
            cols.append(xp[:, i:i + stride * Ho:stride,
                           j:j + stride * Wo:stride, :])
    p = jnp.stack(cols, axis=3)                       # [N,Ho,Wo,kh*kw,C]
    return p.reshape(N * Ho * Wo, kh * kw * C), Ho, Wo


def _pad2(x, rows, cols):
    return jnp.pad(x, ((0, rows - x.shape[0]), (0, cols - x.shape[1])))


def _pad_rows(x, rows):
    return jnp.pad(x, ((0, rows - x.shape[0]), (0, 0)))


def _bn_scale_shift(s_parts, q_parts, count, gamma, beta):
    """Per-channel BN scale/shift from per-tile partial sums (reduced here as a
    small tree, f32): training-mode batch statistics with biased variance
    (nn.BatchNorm2d forward semantics)."""
    s = jnp.sum(s_parts, axis=0)            # (1, Cp)
    q = jnp.sum(q_parts, axis=0)            # (1, Cp)
    mean = s / count
    var = jnp.maximum(q / count - mean * mean, 0.0)
    scale = gamma * lax.rsqrt(var + EPS)
    shift = beta - mean * scale
    return scale, shift


# ------------------------------ BasicBlock ---------------------------------- #

def init_params(key, in_features, out_features, stride, kernel_size=3):
    ks = jax.random.split(key, 6)
    p = {
        # conv weights stored in HWIO (== torch OIHW transposed)
        "w1": 0.1 * jax.random.normal(ks[0], (kernel_size, kernel_size,
                                              in_features, out_features),
                                      jnp.float32),
        "b1": 0.1 * jax.random.normal(ks[1], (1, out_features), jnp.float32),
        "w2": 0.1 * jax.random.normal(ks[2], (kernel_size, kernel_size,
                                              out_features, out_features),
                                      jnp.float32),
        "b2": 0.1 * jax.random.normal(ks[3], (1, out_features), jnp.float32),
        # shared BatchNorm2d (self.bn) — default affine init
        "g": jnp.ones((1, out_features), jnp.float32),
        "bt": jnp.zeros((1, out_features), jnp.float32),
    }
    if in_features != out_features or stride != 1:
        p["ws"] = 0.1 * jax.random.normal(ks[4], (1, 1, in_features,
                                                  out_features), jnp.float32)
        p["bs"] = 0.1 * jax.random.normal(ks[5], (1, out_features), jnp.float32)
        p["gs"] = jnp.ones((1, out_features), jnp.float32)
        p["bts"] = jnp.zeros((1, out_features), jnp.float32)
    return p


def basic_block_forward(x_nhwc, params, stride, *, matmul_dtype=jnp.bfloat16):
    N, H, W, Cin = x_nhwc.shape
    Cout = params["w1"].shape[-1]
    # Gated channel padding: lane-dense 128 multiples for real ResNet widths,
    # sublane granule only for small (toy) widths to avoid 16x wasted HBM bytes.
    Cp = _round_up(Cout, LANE) if Cout >= LANE else _round_up(Cout, SUBLANE)
    has_proj = "ws" in params

    # Cast once to bf16 *before* im2col so the 9x patch tensor is materialized
    # in bf16 directly (no separate pad/cast round trip).
    x_mm = x_nhwc.astype(matmul_dtype)
    p1, Ho, Wo = im2col(x_mm, 3, 3, stride, 1)
    M = N * Ho * Wo
    K1, K2 = p1.shape[1], 9 * Cout

    # ---- VMEM-aware row-tile sizing (per chip, minus resident operands) ---- #
    mm = jnp.dtype(matmul_dtype).itemsize
    res_item = mm if has_proj else 4            # identity residual stays f32
    bytes_per_row = max(
        (K1 + (Cin if has_proj else 0)) * mm
        + (2 if has_proj else 1) * Cp * mm,     # conv1 (+shortcut) stats pass
        K2 * mm + Cp * mm,                      # conv2 stats pass
        2 * Cp * mm,                            # bn+relu pass
        Cp * mm + Cp * res_item + Cp * 4,       # residual pass
    )
    resident_bytes = 2 * mm * Cp * (K1 + K2 + (Cin if has_proj else 0)) \
        + 16 * Cp * 4                           # weights (x2 buffers) + scales
    budget = max(VMEM_TILE_BUDGET - resident_bytes, 2 * 1024 * 1024)
    tile_m = _pick_tile_m(M, bytes_per_row, budget)
    M_pad = _round_up(M, tile_m)

    # NOTE: conv bias is dropped on the kernel path; the training-mode
    # BatchNorm immediately following each conv cancels it exactly, and with
    # no bias the zero-padded rows contribute exactly 0 to the statistics.
    p1p = _pad_rows(p1, M_pad)
    w1p = _pad2(params["w1"].reshape(K1, Cout), K1, Cp).astype(matmul_dtype)
    g = _pad2(params["g"], 1, Cp)
    bt = _pad2(params["bt"], 1, Cp)

    if has_proj:
        # 1x1 strided shortcut patches are just a spatial subsample of x.
        ps = x_mm[:, ::stride, ::stride, :].reshape(M, Cin)
        psp = _pad_rows(ps, M_pad)
        wsp = _pad2(params["ws"].reshape(Cin, Cout), Cin, Cp).astype(matmul_dtype)
        y1, res, s1, q1, ss, qs = conv_pair_stats(p1p, w1p, psp, wsp, tile_m,
                                                  matmul_dtype)
        scale_s, shift_s = _bn_scale_shift(ss, qs, M,
                                           _pad2(params["gs"], 1, Cp),
                                           _pad2(params["bts"], 1, Cp))
    else:
        y1, s1, q1 = conv_stats(p1p, w1p, tile_m, matmul_dtype)
        # Identity shortcut (Cin == Cout, stride == 1): residual is x itself,
        # fed directly (f32, no 128-lane padding blow-up).
        res = _pad2(x_nhwc.reshape(M, Cin), M_pad, Cp)
        scale_s = jnp.ones((1, Cp), jnp.float32)
        shift_s = jnp.zeros((1, Cp), jnp.float32)

    # out1 = relu(bn(conv1(x)))  — stored bf16 (only feeds conv2's matmul)
    scale1, shift1 = _bn_scale_shift(s1, q1, M, g, bt)
    a1 = bn_relu(y1, scale1, shift1, tile_m, matmul_dtype)
    a1_img = a1[:M, :Cout].reshape(N, Ho, Wo, Cout)

    # conv2 + its BN statistics (same shared self.bn affine parameters).
    p2, _, _ = im2col(a1_img, 3, 3, 1, 1)                     # bf16 patches
    p2p = _pad_rows(p2, M_pad)
    w2p = _pad2(params["w2"].reshape(K2, Cout), K2, Cp).astype(matmul_dtype)
    y2, s2, q2 = conv_stats(p2p, w2p, tile_m, matmul_dtype)
    scale2, shift2 = _bn_scale_shift(s2, q2, M, g, bt)

    # out = relu(relu(bn(conv2(out1))) + shortcut(x))
    out = bn_relu_residual(y2, scale2, shift2, res, scale_s, shift_s, tile_m)
    return out[:M, :Cout].reshape(N, Ho, Wo, Cout)


# ------------------------------ pure-JAX reference --------------------------- #

def ref_forward(x_nhwc, params, stride, matmul_dtype=jnp.float32):
    """Reference with the PyTorch BasicBlock semantics (training-mode BN,
    shared self.bn for both convs, conv bias included).  matmul_dtype lets the
    reference mirror the kernel's bf16 matmul-operand precision."""
    def conv(x, w, b, s, p):
        y = lax.conv_general_dilated(
            x.astype(matmul_dtype), w.astype(matmul_dtype), (s, s),
            [(p, p), (p, p)], dimension_numbers=("NHWC", "HWIO", "NHWC"),
            preferred_element_type=jnp.float32)
        return y + b.reshape(1, 1, 1, -1)

    def bn(y, g, bt):
        m = jnp.mean(y, axis=(0, 1, 2), keepdims=True)
        v = jnp.mean(jnp.square(y - m), axis=(0, 1, 2), keepdims=True)
        return ((y - m) * lax.rsqrt(v + EPS) * g.reshape(1, 1, 1, -1)
                + bt.reshape(1, 1, 1, -1))

    a1 = jax.nn.relu(bn(conv(x_nhwc, params["w1"], params["b1"], stride, 1),
                        params["g"], params["bt"]))
    a2 = jax.nn.relu(bn(conv(a1, params["w2"], params["b2"], 1, 1),
                        params["g"], params["bt"]))
    if "ws" in params:
        sc = bn(conv(x_nhwc, params["ws"], params["bs"], stride, 0),
                params["gs"], params["bts"])
    else:
        sc = x_nhwc
    return jax.nn.relu(a2 + sc)


# ----------------------------------- main ------------------------------------ #

def _check(x_nhwc, params, stride, expect_shape):
    fwd = jax.jit(functools.partial(basic_block_forward, stride=stride))
    out = jax.block_until_ready(fwd(x_nhwc, params))
    ref_mm = ref_forward(x_nhwc, params, stride, matmul_dtype=jnp.bfloat16)
    ref_f32 = ref_forward(x_nhwc, params, stride, matmul_dtype=jnp.float32)
    assert out.shape == expect_shape, (out.shape, expect_shape)
    # vs bf16-matmul reference: remaining error is bf16 *storage* of the
    # y1/ys/y2/a1 intermediates (stats themselves are f32), ~1e-2 scale.
    assert jnp.allclose(out, ref_mm, atol=5e-2, rtol=5e-2), (
        "mismatch vs bf16-matmul reference: "
        f"max_abs_err={float(jnp.max(jnp.abs(out - ref_mm)))}")
    # Sanity check vs the full-f32 reference (bf16 operand + storage rounding).
    assert jnp.allclose(out, ref_f32, atol=1e-1, rtol=1e-1), (
        "mismatch vs f32 reference: "
        f"max_abs_err={float(jnp.max(jnp.abs(out - ref_f32)))}")


if __name__ == "__main__":
    key = jax.random.PRNGKey(0)
    k1, k2, k3, k4 = jax.random.split(key, 4)

    # Config 1: projection shortcut (in=4 -> out=8, stride=2), NCHW like torch.
    x_nchw = jax.random.normal(k1, (2, 4, 16, 16), jnp.float32)
    x_nhwc = jnp.transpose(x_nchw, (0, 2, 3, 1))   # NHWC for the kernels
    params = init_params(k2, 4, 8, 2)
    _check(x_nhwc, params, 2, (2, 8, 8, 8))

    # Config 2: identity shortcut (in == out == 8, stride = 1).
    x2_nchw = jax.random.normal(k3, (2, 8, 8, 8), jnp.float32)
    x2_nhwc = jnp.transpose(x2_nchw, (0, 2, 3, 1))
    params2 = init_params(k4, 8, 8, 1)
    _check(x2_nhwc, params2, 1, (2, 8, 8, 8))

    print("KERNEL_OK")
</pallas_src>

<mosaic_0001>
module attributes {stable_mosaic.version = 11 : i64} {
  func.func @_conv_pair_stats_kernel(%arg0: i32, %arg1: memref<128x36xbf16, #tpu.memory_space<vmem>>, %arg2: memref<36x8xbf16, #tpu.memory_space<vmem>>, %arg3: memref<128x4xbf16, #tpu.memory_space<vmem>>, %arg4: memref<4x8xbf16, #tpu.memory_space<vmem>>, %arg5: memref<128x8xbf16, #tpu.memory_space<vmem>>, %arg6: memref<128x8xbf16, #tpu.memory_space<vmem>>, %arg7: memref<1x1x8xf32, #tpu.memory_space<vmem>>, %arg8: memref<1x1x8xf32, #tpu.memory_space<vmem>>, %arg9: memref<1x1x8xf32, #tpu.memory_space<vmem>>, %arg10: memref<1x1x8xf32, #tpu.memory_space<vmem>>) attributes {dimension_semantics = [#tpu.dimension_semantics<parallel>], iteration_bounds = array<i64: 1>, scalar_prefetch = 0 : i64, scratch_operands = 0 : i64, tpu.core_type = #tpu.core_type<tc>, window_params = [{transform_indices = @transform_0, window_bounds = array<i64: 128, 36>}, {pipeline_mode = #tpu.pipeline_mode<synchronous>, transform_indices = @transform_1, window_bounds = array<i64: 36, 8>}, {transform_indices = @transform_2, window_bounds = array<i64: 128, 4>}, {pipeline_mode = #tpu.pipeline_mode<synchronous>, transform_indices = @transform_3, window_bounds = array<i64: 4, 8>}, {transform_indices = @transform_4, window_bounds = array<i64: 128, 8>}, {transform_indices = @transform_5, window_bounds = array<i64: 128, 8>}, {transform_indices = @transform_6, window_bounds = array<i64: 1, 1, 8>}, {transform_indices = @transform_7, window_bounds = array<i64: 1, 1, 8>}, {transform_indices = @transform_8, window_bounds = array<i64: 1, 1, 8>}, {transform_indices = @transform_9, window_bounds = array<i64: 1, 1, 8>}]} {
    %c0 = arith.constant 0 : index
    %c0_0 = arith.constant 0 : index
    %0 = vector.load %arg1[%c0, %c0_0] : memref<128x36xbf16, #tpu.memory_space<vmem>>, vector<128x36xbf16>
    %c0_1 = arith.constant 0 : index
    %c0_2 = arith.constant 0 : index
    %1 = vector.load %arg2[%c0_1, %c0_2] : memref<36x8xbf16, #tpu.memory_space<vmem>>, vector<36x8xbf16>
    %cst = arith.constant dense<0.000000e+00> : vector<128x8xf32>
    %2 = tpu.matmul %0, %1, %cst {dimension_numbers = #tpu.dot_dimension_numbers<[1], [0], [0], [1], [0, 0, 1, 1], [], []>} : vector<128x36xbf16>, vector<36x8xbf16>, vector<128x8xf32> -> vector<128x8xf32>
    %c0_3 = arith.constant 0 : index
    %c0_4 = arith.constant 0 : index
    %3 = vector.load %arg3[%c0_3, %c0_4] : memref<128x4xbf16, #tpu.memory_space<vmem>>, vector<128x4xbf16>
    %c0_5 = arith.constant 0 : index
    %c0_6 = arith.constant 0 : index
    %4 = vector.load %arg4[%c0_5, %c0_6] : memref<4x8xbf16, #tpu.memory_space<vmem>>, vector<4x8xbf16>
    %cst_7 = arith.constant dense<0.000000e+00> : vector<128x8xf32>
    %5 = tpu.matmul %3, %4, %cst_7 {dimension_numbers = #tpu.dot_dimension_numbers<[1], [0], [0], [1], [0, 0, 1, 1], [], []>} : vector<128x4xbf16>, vector<4x8xbf16>, vector<128x8xf32> -> vector<128x8xf32>
    %6 = arith.truncf %2 : vector<128x8xf32> to vector<128x8xbf16>
    %c0_8 = arith.constant 0 : index
    %c0_9 = arith.constant 0 : index
    %7 = vector.load %arg5[%c0_8, %c0_9] : memref<128x8xbf16, #tpu.memory_space<vmem>>, vector<128x8xbf16>
    tpu.vector_store %arg5[%c0_8, %c0_9], %6 {strides = array<i32>} : memref<128x8xbf16, #tpu.memory_space<vmem>>, vector<128x8xbf16>,
    %8 = arith.truncf %5 : vector<128x8xf32> to vector<128x8xbf16>
    %c0_10 = arith.constant 0 : index
    %c0_11 = arith.constant 0 : index
    %9 = vector.load %arg6[%c0_10, %c0_11] : memref<128x8xbf16, #tpu.memory_space<vmem>>, vector<128x8xbf16>
    tpu.vector_store %arg6[%c0_10, %c0_11], %8 {strides = array<i32>} : memref<128x8xbf16, #tpu.memory_space<vmem>>, vector<128x8xbf16>,
    %cst_12 = arith.constant dense<0.000000e+00> : vector<8xf32>
    %10 = vector.multi_reduction <add>, %2, %cst_12 [0] : vector<128x8xf32> to vector<8xf32>
    %11 = vector.shape_cast %10 : vector<8xf32> to vector<1x8xf32>
    %c0_13 = arith.constant 0 : index
    %c0_14 = arith.constant 0 : index
    %c0_15 = arith.constant 0 : index
    %12 = vector.load %arg7[%c0_13, %c0_14, %c0_15] : memref<1x1x8xf32, #tpu.memory_space<vmem>>, vector<1x1x8xf32>
    %13 = vector.shape_cast %12 : vector<1x1x8xf32> to vector<1x8xf32>
    %14 = vector.shape_cast %11 : vector<1x8xf32> to vector<1x1x8xf32>
    tpu.vector_store %arg7[%c0_13, %c0_14, %c0_15], %14 {strides = array<i32>} : memref<1x1x8xf32, #tpu.memory_space<vmem>>, vector<1x1x8xf32>,
    %15 = arith.mulf %2, %2 : vector<128x8xf32>
    %cst_16 = arith.constant dense<0.000000e+00> : vector<8xf32>
    %16 = vector.multi_reduction <add>, %15, %cst_16 [0] : vector<128x8xf32> to vector<8xf32>
    %17 = vector.shape_cast %16 : vector<8xf32> to vector<1x8xf32>
    %c0_17 = arith.constant 0 : index
    %c0_18 = arith.constant 0 : index
    %c0_19 = arith.constant 0 : index
    %18 = vector.load %arg8[%c0_17, %c0_18, %c0_19] : memref<1x1x8xf32, #tpu.memory_space<vmem>>, vector<1x1x8xf32>
    %19 = vector.shape_cast %18 : vector<1x1x8xf32> to vector<1x8xf32>
    %20 = vector.shape_cast %17 : vector<1x8xf32> to vector<1x1x8xf32>
    tpu.vector_store %arg8[%c0_17, %c0_18, %c0_19], %20 {strides = array<i32>} : memref<1x1x8xf32, #tpu.memory_space<vmem>>, vector<1x1x8xf32>,
    %cst_20 = arith.constant dense<0.000000e+00> : vector<8xf32>
    %21 = vector.multi_reduction <add>, %5, %cst_20 [0] : vector<128x8xf32> to vector<8xf32>
    %22 = vector.shape_cast %21 : vector<8xf32> to vector<1x8xf32>
    %c0_21 = arith.constant 0 : index
    %c0_22 = arith.constant 0 : index
    %c0_23 = arith.constant 0 : index
    %23 = vector.load %arg9[%c0_21, %c0_22, %c0_23] : memref<1x1x8xf32, #tpu.memory_space<vmem>>, vector<1x1x8xf32>
    %24 = vector.shape_cast %23 : vector<1x1x8xf32> to vector<1x8xf32>
    %25 = vector.shape_cast %22 : vector<1x8xf32> to vector<1x1x8xf32>
    tpu.vector_store %arg9[%c0_21, %c0_22, %c0_23], %25 {strides = array<i32>} : memref<1x1x8xf32, #tpu.memory_space<vmem>>, vector<1x1x8xf32>,
    %26 = arith.mulf %5, %5 : vector<128x8xf32>
    %cst_24 = arith.constant dense<0.000000e+00> : vector<8xf32>
    %27 = vector.multi_reduction <add>, %26, %cst_24 [0] : vector<128x8xf32> to vector<8xf32>
    %28 = vector.shape_cast %27 : vector<8xf32> to vector<1x8xf32>
    %c0_25 = arith.constant 0 : index
    %c0_26 = arith.constant 0 : index
    %c0_27 = arith.constant 0 : index
    %29 = vector.load %arg10[%c0_25, %c0_26, %c0_27] : memref<1x1x8xf32, #tpu.memory_space<vmem>>, vector<1x1x8xf32>
    %30 = vector.shape_cast %29 : vector<1x1x8xf32> to vector<1x8xf32>
    %31 = vector.shape_cast %28 : vector<1x8xf32> to vector<1x1x8xf32>
    tpu.vector_store %arg10[%c0_25, %c0_26, %c0_27], %31 {strides = array<i32>} : memref<1x1x8xf32, #tpu.memory_space<vmem>>, vector<1x1x8xf32>,
    return
  }
  func.func @transform_0(%arg0: i32) -> (i32, i32) {
    %c0_i32 = arith.constant 0 : i32
    %c0_i32_0 = arith.constant 0 : i32
    return %arg0, %c0_i32 : i32, i32
  }
  func.func @transform_1(%arg0: i32) -> (i32, i32) {
    %c0_i32 = arith.constant 0 : i32
    %c0_i32_0 = arith.constant 0 : i32
    %c0_i32_1 = arith.constant 0 : i32
    return %c0_i32, %c0_i32_0 : i32, i32
  }
  func.func @transform_2(%arg0: i32) -> (i32, i32) {
    %c0_i32 = arith.constant 0 : i32
    %c0_i32_0 = arith.constant 0 : i32
    return %arg0, %c0_i32 : i32, i32
  }
  func.func @transform_3(%arg0: i32) -> (i32, i32) {
    %c0_i32 = arith.constant 0 : i32
    %c0_i32_0 = arith.constant 0 : i32
    %c0_i32_1 = arith.constant 0 : i32
    return %c0_i32, %c0_i32_0 : i32, i32
  }
  func.func @transform_4(%arg0: i32) -> (i32, i32) {
    %c0_i32 = arith.constant 0 : i32
    %c0_i32_0 = arith.constant 0 : i32
    return %arg0, %c0_i32 : i32, i32
  }
  func.func @transform_5(%arg0: i32) -> (i32, i32) {
    %c0_i32 = arith.constant 0 : i32
    %c0_i32_0 = arith.constant 0 : i32
    return %arg0, %c0_i32 : i32, i32
  }
  func.func @transform_6(%arg0: i32) -> (i32, i32, i32) {
    %c0_i32 = arith.constant 0 : i32
    %c0_i32_0 = arith.constant 0 : i32
    %c0_i32_1 = arith.constant 0 : i32
    return %arg0, %c0_i32, %c0_i32_0 : i32, i32, i32
  }
  func.func @transform_7(%arg0: i32) -> (i32, i32, i32) {
    %c0_i32 = arith.constant 0 : i32
    %c0_i32_0 = arith.constant 0 : i32
    %c0_i32_1 = arith.constant 0 : i32
    return %arg0, %c0_i32, %c0_i32_0 : i32, i32, i32
  }
  func.func @transform_8(%arg0: i32) -> (i32, i32, i32) {
    %c0_i32 = arith.constant 0 : i32
    %c0_i32_0 = arith.constant 0 : i32
    %c0_i32_1 = arith.constant 0 : i32
    return %arg0, %c0_i32, %c0_i32_0 : i32, i32, i32
  }
  func.func @transform_9(%arg0: i32) -> (i32, i32, i32) {
    %c0_i32 = arith.constant 0 : i32
    %c0_i32_0 = arith.constant 0 : i32
    %c0_i32_1 = arith.constant 0 : i32
    return %arg0, %c0_i32, %c0_i32_0 : i32, i32, i32
  }
}

module attributes {stable_mosaic.version = 11 : i64} {
  func.func @_bn_relu_kernel(%arg0: i32, %arg1: memref<128x8xbf16, #tpu.memory_space<vmem>>, %arg2: memref<1x8xf32, #tpu.memory_space<vmem>>, %arg3: memref<1x8xf32, #tpu.memory_space<vmem>>, %arg4: memref<128x8xbf16, #tpu.memory_space<vmem>>) attributes {dimension_semantics = [#tpu.dimension_semantics<parallel>], iteration_bounds = array<i64: 1>, scalar_prefetch = 0 : i64, scratch_operands = 0 : i64, tpu.core_type = #tpu.core_type<tc>, window_params = [{transform_indices = @transform_0, window_bounds = array<i64: 128, 8>}, {pipeline_mode = #tpu.pipeline_mode<synchronous>, transform_indices = @transform_1, window_bounds = array<i64: 1, 8>}, {pipeline_mode = #tpu.pipeline_mode<synchronous>, transform_indices = @transform_2, window_bounds = array<i64: 1, 8>}, {transform_indices = @transform_3, window_bounds = array<i64: 128, 8>}]} {
    %c0 = arith.constant 0 : index
    %c0_0 = arith.constant 0 : index
    %0 = vector.load %arg1[%c0, %c0_0] : memref<128x8xbf16, #tpu.memory_space<vmem>>, vector<128x8xbf16>
    %1 = arith.extf %0 : vector<128x8xbf16> to vector<128x8xf32>
    %c0_1 = arith.constant 0 : index
    %c0_2 = arith.constant 0 : index
    %2 = vector.load %arg2[%c0_1, %c0_2] : memref<1x8xf32, #tpu.memory_space<vmem>>, vector<1x8xf32>
    %3 = vector.broadcast %2 : vector<1x8xf32> to vector<128x8xf32>
    %4 = arith.mulf %1, %3 : vector<128x8xf32>
    %c0_3 = arith.constant 0 : index
    %c0_4 = arith.constant 0 : index
    %5 = vector.load %arg3[%c0_3, %c0_4] : memref<1x8xf32, #tpu.memory_space<vmem>>, vector<1x8xf32>
    %6 = vector.broadcast %5 : vector<1x8xf32> to vector<128x8xf32>
    %7 = arith.addf %4, %6 : vector<128x8xf32>
    %cst = arith.constant 0.000000e+00 : f32
    %8 = vector.broadcast %cst : f32 to vector<128x8xf32>
    %9 = arith.maximumf %7, %8 : vector<128x8xf32>
    %10 = arith.truncf %9 : vector<128x8xf32> to vector<128x8xbf16>
    %c0_5 = arith.constant 0 : index
    %c0_6 = arith.constant 0 : index
    %11 = vector.load %arg4[%c0_5, %c0_6] : memref<128x8xbf16, #tpu.memory_space<vmem>>, vector<128x8xbf16>
    tpu.vector_store %arg4[%c0_5, %c0_6], %10 {strides = array<i32>} : memref<128x8xbf16, #tpu.memory_space<vmem>>, vector<128x8xbf16>,
    return
  }
  func.func @transform_0(%arg0: i32) -> (i32, i32) {
    %c0_i32 = arith.constant 0 : i32
    %c0_i32_0 = arith.constant 0 : i32
    return %arg0, %c0_i32 : i32, i32
  }
  func.func @transform_1(%arg0: i32) -> (i32, i32) {
    %c0_i32 = arith.constant 0 : i32
    %c0_i32_0 = arith.constant 0 : i32
    %c0_i32_1 = arith.constant 0 : i32
    return %c0_i32, %c0_i32_0 : i32, i32
  }
  func.func @transform_2(%arg0: i32) -> (i32, i32) {
    %c0_i32 = arith.constant 0 : i32
    %c0_i32_0 = arith.constant 0 : i32
    %c0_i32_1 = arith.constant 0 : i32
    return %c0_i32, %c0_i32_0 : i32, i32
  }
  func.func @transform_3(%arg0: i32) -> (i32, i32) {
    %c0_i32 = arith.constant 0 : i32
    %c0_i32_0 = arith.constant 0 : i32
    return %arg0, %c0_i32 : i32, i32
  }
}

module attributes {stable_mosaic.version = 11 : i64} {
  func.func @_bn_relu_residual_kernel(%arg0: i32, %arg1: memref<128x8xbf16, #tpu.memory_space<vmem>>, %arg2: memref<1x8xf32, #tpu.memory_space<vmem>>, %arg3: memref<1x8xf32, #tpu.memory_space<vmem>>, %arg4: memref<128x8xbf16, #tpu.memory_space<vmem>>, %arg5: memref<1x8xf32, #tpu.memory_space<vmem>>, %arg6: memref<1x8xf32, #tpu.memory_space<vmem>>, %arg7: memref<128x8xf32, #tpu.memory_space<vmem>>) attributes {dimension_semantics = [#tpu.dimension_semantics<parallel>], iteration_bounds = array<i64: 1>, scalar_prefetch = 0 : i64, scratch_operands = 0 : i64, tpu.core_type = #tpu.core_type<tc>, window_params = [{transform_indices = @transform_0, window_bounds = array<i64: 128, 8>}, {pipeline_mode = #tpu.pipeline_mode<synchronous>, transform_indices = @transform_1, window_bounds = array<i64: 1, 8>}, {pipeline_mode = #tpu.pipeline_mode<synchronous>, transform_indices = @transform_2, window_bounds = array<i64: 1, 8>}, {transform_indices = @transform_3, window_bounds = array<i64: 128, 8>}, {pipeline_mode = #tpu.pipeline_mode<synchronous>, transform_indices = @transform_4, window_bounds = array<i64: 1, 8>}, {pipeline_mode = #tpu.pipeline_mode<synchronous>, transform_indices = @transform_5, window_bounds = array<i64: 1, 8>}, {transform_indices = @transform_6, window_bounds = array<i64: 128, 8>}]} {
    %c0 = arith.constant 0 : index
    %c0_0 = arith.constant 0 : index
    %0 = vector.load %arg1[%c0, %c0_0] : memref<128x8xbf16, #tpu.memory_space<vmem>>, vector<128x8xbf16>
    %1 = arith.extf %0 : vector<128x8xbf16> to vector<128x8xf32>
    %c0_1 = arith.constant 0 : index
    %c0_2 = arith.constant 0 : index
    %2 = vector.load %arg2[%c0_1, %c0_2] : memref<1x8xf32, #tpu.memory_space<vmem>>, vector<1x8xf32>
    %3 = vector.broadcast %2 : vector<1x8xf32> to vector<128x8xf32>
    %4 = arith.mulf %1, %3 : vector<128x8xf32>
    %c0_3 = arith.constant 0 : index
    %c0_4 = arith.constant 0 : index
    %5 = vector.load %arg3[%c0_3, %c0_4] : memref<1x8xf32, #tpu.memory_space<vmem>>, vector<1x8xf32>
    %6 = vector.broadcast %5 : vector<1x8xf32> to vector<128x8xf32>
    %7 = arith.addf %4, %6 : vector<128x8xf32>
    %cst = arith.constant 0.000000e+00 : f32
    %8 = vector.broadcast %cst : f32 to vector<128x8xf32>
    %9 = arith.maximumf %7, %8 : vector<128x8xf32>
    %c0_5 = arith.constant 0 : index
    %c0_6 = arith.constant 0 : index
    %10 = vector.load %arg4[%c0_5, %c0_6] : memref<128x8xbf16, #tpu.memory_space<vmem>>, vector<128x8xbf16>
    %11 = arith.extf %10 : vector<128x8xbf16> to vector<128x8xf32>
    %c0_7 = arith.constant 0 : index
    %c0_8 = arith.constant 0 : index
    %12 = vector.load %arg5[%c0_7, %c0_8] : memref<1x8xf32, #tpu.memory_space<vmem>>, vector<1x8xf32>
    %13 = vector.broadcast %12 : vector<1x8xf32> to vector<128x8xf32>
    %14 = arith.mulf %11, %13 : vector<128x8xf32>
    %c0_9 = arith.constant 0 : index
    %c0_10 = arith.constant 0 : index
    %15 = vector.load %arg6[%c0_9, %c0_10] : memref<1x8xf32, #tpu.memory_space<vmem>>, vector<1x8xf32>
    %16 = vector.broadcast %15 : vector<1x8xf32> to vector<128x8xf32>
    %17 = arith.addf %14, %16 : vector<128x8xf32>
    %18 = arith.addf %9, %17 : vector<128x8xf32>
    %cst_11 = arith.constant 0.000000e+00 : f32
    %19 = vector.broadcast %cst_11 : f32 to vector<128x8xf32>
    %20 = arith.maximumf %18, %19 : vector<128x8xf32>
    %c0_12 = arith.constant 0 : index
    %c0_13 = arith.constant 0 : index
    %21 = vector.load %arg7[%c0_12, %c0_13] : memref<128x8xf32, #tpu.memory_space<vmem>>, vector<128x8xf32>
    tpu.vector_store %arg7[%c0_12, %c0_13], %20 {strides = array<i32>} : memref<128x8xf32, #tpu.memory_space<vmem>>, vector<128x8xf32>,
    return
  }
  func.func @transform_0(%arg0: i32) -> (i32, i32) {
    %c0_i32 = arith.constant 0 : i32
    %c0_i32_0 = arith.constant 0 : i32
    return %arg0, %c0_i32 : i32, i32
  }
  func.func @transform_1(%arg0: i32) -> (i32, i32) {
    %c0_i32 = arith.constant 0 : i32
    %c0_i32_0 = arith.constant 0 : i32
    %c0_i32_1 = arith.constant 0 : i32
    return %c0_i32, %c0_i32_0 : i32, i32
  }
  func.func @transform_2(%arg0: i32) -> (i32, i32) {
    %c0_i32 = arith.constant 0 : i32
    %c0_i32_0 = arith.constant 0 : i32
    %c0_i32_1 = arith.constant 0 : i32
    return %c0_i32, %c0_i32_0 : i32, i32
  }
  func.func @transform_3(%arg0: i32) -> (i32, i32) {
    %c0_i32 = arith.constant 0 : i32
    %c0_i32_0 = arith.constant 0 : i32
    return %arg0, %c0_i32 : i32, i32
  }
  func.func @transform_4(%arg0: i32) -> (i32, i32) {
    %c0_i32 = arith.constant 0 : i32
    %c0_i32_0 = arith.constant 0 : i32
    %c0_i32_1 = arith.constant 0 : i32
    return %c0_i32, %c0_i32_0 : i32, i32
  }
  func.func @transform_5(%arg0: i32) -> (i32, i32) {
    %c0_i32 = arith.constant 0 : i32
    %c0_i32_0 = arith.constant 0 : i32
    %c0_i32_1 = arith.constant 0 : i32
    return %c0_i32, %c0_i32_0 : i32, i32
  }
  func.func @transform_6(%arg0: i32) -> (i32, i32) {
    %c0_i32 = arith.constant 0 : i32
    %c0_i32_0 = arith.constant 0 : i32
    return %arg0, %c0_i32 : i32, i32
  }
}

module attributes {stable_mosaic.version = 11 : i64} {
  func.func @_conv_stats_kernel(%arg0: i32, %arg1: memref<128x72xbf16, #tpu.memory_space<vmem>>, %arg2: memref<72x8xbf16, #tpu.memory_space<vmem>>, %arg3: memref<128x8xbf16, #tpu.memory_space<vmem>>, %arg4: memref<1x1x8xf32, #tpu.memory_space<vmem>>, %arg5: memref<1x1x8xf32, #tpu.memory_space<vmem>>) attributes {dimension_semantics = [#tpu.dimension_semantics<parallel>], iteration_bounds = array<i64: 1>, scalar_prefetch = 0 : i64, scratch_operands = 0 : i64, tpu.core_type = #tpu.core_type<tc>, window_params = [{transform_indices = @transform_0, window_bounds = array<i64: 128, 72>}, {pipeline_mode = #tpu.pipeline_mode<synchronous>, transform_indices = @transform_1, window_bounds = array<i64: 72, 8>}, {transform_indices = @transform_2, window_bounds = array<i64: 128, 8>}, {transform_indices = @transform_3, window_bounds = array<i64: 1, 1, 8>}, {transform_indices = @transform_4, window_bounds = array<i64: 1, 1, 8>}]} {
    %c0 = arith.constant 0 : index
    %c0_0 = arith.constant 0 : index
    %0 = vector.load %arg1[%c0, %c0_0] : memref<128x72xbf16, #tpu.memory_space<vmem>>, vector<128x72xbf16>
    %c0_1 = arith.constant 0 : index
    %c0_2 = arith.constant 0 : index
    %1 = vector.load %arg2[%c0_1, %c0_2] : memref<72x8xbf16, #tpu.memory_space<vmem>>, vector<72x8xbf16>
    %cst = arith.constant dense<0.000000e+00> : vector<128x8xf32>
    %2 = tpu.matmul %0, %1, %cst {dimension_numbers = #tpu.dot_dimension_numbers<[1], [0], [0], [1], [0, 0, 1, 1], [], []>} : vector<128x72xbf16>, vector<72x8xbf16>, vector<128x8xf32> -> vector<128x8xf32>
    %3 = arith.truncf %2 : vector<128x8xf32> to vector<128x8xbf16>
    %c0_3 = arith.constant 0 : index
    %c0_4 = arith.constant 0 : index
    %4 = vector.load %arg3[%c0_3, %c0_4] : memref<128x8xbf16, #tpu.memory_space<vmem>>, vector<128x8xbf16>
    tpu.vector_store %arg3[%c0_3, %c0_4], %3 {strides = array<i32>} : memref<128x8xbf16, #tpu.memory_space<vmem>>, vector<128x8xbf16>,
    %cst_5 = arith.constant dense<0.000000e+00> : vector<8xf32>
    %5 = vector.multi_reduction <add>, %2, %cst_5 [0] : vector<128x8xf32> to vector<8xf32>
    %6 = vector.shape_cast %5 : vector<8xf32> to vector<1x8xf32>
    %c0_6 = arith.constant 0 : index
    %c0_7 = arith.constant 0 : index
    %c0_8 = arith.constant 0 : index
    %7 = vector.load %arg4[%c0_6, %c0_7, %c0_8] : memref<1x1x8xf32, #tpu.memory_space<vmem>>, vector<1x1x8xf32>
    %8 = vector.shape_cast %7 : vector<1x1x8xf32> to vector<1x8xf32>
    %9 = vector.shape_cast %6 : vector<1x8xf32> to vector<1x1x8xf32>
    tpu.vector_store %arg4[%c0_6, %c0_7, %c0_8], %9 {strides = array<i32>} : memref<1x1x8xf32, #tpu.memory_space<vmem>>, vector<1x1x8xf32>,
    %10 = arith.mulf %2, %2 : vector<128x8xf32>
    %cst_9 = arith.constant dense<0.000000e+00> : vector<8xf32>
    %11 = vector.multi_reduction <add>, %10, %cst_9 [0] : vector<128x8xf32> to vector<8xf32>
    %12 = vector.shape_cast %11 : vector<8xf32> to vector<1x8xf32>
    %c0_10 = arith.constant 0 : index
    %c0_11 = arith.constant 0 : index
    %c0_12 = arith.constant 0 : index
    %13 = vector.load %arg5[%c0_10, %c0_11, %c0_12] : memref<1x1x8xf32, #tpu.memory_space<vmem>>, vector<1x1x8xf32>
    %14 = vector.shape_cast %13 : vector<1x1x8xf32> to vector<1x8xf32>
    %15 = vector.shape_cast %12 : vector<1x8xf32> to vector<1x1x8xf32>
    tpu.vector_store %arg5[%c0_10, %c0_11, %c0_12], %15 {strides = array<i32>} : memref<1x1x8xf32, #tpu.memory_space<vmem>>, vector<1x1x8xf32>,
    return
  }
  func.func @transform_0(%arg0: i32) -> (i32, i32) {
    %c0_i32 = arith.constant 0 : i32
    %c0_i32_0 = arith.constant 0 : i32
    return %arg0, %c0_i32 : i32, i32
  }
  func.func @transform_1(%arg0: i32) -> (i32, i32) {
    %c0_i32 = arith.constant 0 : i32
    %c0_i32_0 = arith.constant 0 : i32
    %c0_i32_1 = arith.constant 0 : i32
    return %c0_i32, %c0_i32_0 : i32, i32
  }
  func.func @transform_2(%arg0: i32) -> (i32, i32) {
    %c0_i32 = arith.constant 0 : i32
    %c0_i32_0 = arith.constant 0 : i32
    return %arg0, %c0_i32 : i32, i32
  }
  func.func @transform_3(%arg0: i32) -> (i32, i32, i32) {
    %c0_i32 = arith.constant 0 : i32
    %c0_i32_0 = arith.constant 0 : i32
    %c0_i32_1 = arith.constant 0 : i32
    return %arg0, %c0_i32, %c0_i32_0 : i32, i32, i32
  }
  func.func @transform_4(%arg0: i32) -> (i32, i32, i32) {
    %c0_i32 = arith.constant 0 : i32
    %c0_i32_0 = arith.constant 0 : i32
    %c0_i32_1 = arith.constant 0 : i32
    return %arg0, %c0_i32, %c0_i32_0 : i32, i32, i32
  }
}

</mosaic_0001>

<llo_original>
// kernel: basic_block_forward.5
$region0: #{basic_block_forward.5}
  #allocation0 [shape = 'u32[]', space=smem, size = 0x4, offset = 0x4, fixed_abs, tag = 'smem constant byte address 0x4 - core index']
  #allocation1 [shape = 'u32[144,128]{1,0:T(1,128)}', space=vmem, size = 0x12000, scoped, tag = 'internal scratch']
  %s0 = inlined_call_operand.vmem [shape: bf16[128,8], index: 0, kind: input, shape index: {}]
  %s1 = inlined_call_operand.vmem [shape: f32[1,8], index: 1, kind: input, shape index: {}]
  %s2 = inlined_call_operand.vmem [shape: f32[1,8], index: 2, kind: input, shape index: {}]
  %s3 = inlined_call_operand.vmem [shape: bf16[128,8], index: 3, kind: output, shape index: {}]
  %s4 = sld [smem:[#allocation0]]
  $region22: #{basic_block_forward.5} parent=0
    _
  %s6 = ssub.s32 1, %s4
  %s7 = scalar_select 0, %s6, %s4
  // Predicated region
  $region2: #{basic_block_forward.5} parent=0 // pred_check
    _
  $region3: #{basic_block_forward.5} parent=0 // pred_check_branch
    %9 = sbr.rel (0) target = $region5
  $region4: #{basic_block_forward.5} parent=0 // pred_region
    _
  $region5: #{basic_block_forward.5} parent=0 // pred_fallthru
    _
  // Predicated region
  $region6: #{basic_block_forward.5} parent=0 // pred_check
    _
  $region7: #{basic_block_forward.5} parent=0 // pred_check_branch
    %11 = sbr.rel (0) target = $region9
  $region8: #{basic_block_forward.5} parent=0 // pred_region
    _
  $region9: #{basic_block_forward.5} parent=0 // pred_fallthru
    _
  // Predicated region
  $region10: #{basic_block_forward.5} parent=0 // pred_check
    _
  $region11: #{basic_block_forward.5} parent=0 // pred_check_branch
    %13 = sbr.rel (0) target = $region13
  $region12: #{basic_block_forward.5} parent=0 // pred_region
    _
  $region13: #{basic_block_forward.5} parent=0 // pred_fallthru
    _
  %v14 = vld [vmem:[%s0] sm:$0xf]
  %v15 = vld [vmem:[%s0 + $0x4] sm:$0xf]
  %v16 = vld [vmem:[%s0 + $0x8] sm:$0xf]
  %v17 = vld [vmem:[%s0 + $0xc] sm:$0xf]
  %v18 = vld [vmem:[%s0 + $0x10] sm:$0xf]
  %v19 = vld [vmem:[%s0 + $0x14] sm:$0xf]
  %v20 = vld [vmem:[%s0 + $0x18] sm:$0xf]
  %v21 = vld [vmem:[%s0 + $0x1c] sm:$0xf]
  %v22 = vld [vmem:[%s0 + $0x20] sm:$0xf]
  %v23 = vld [vmem:[%s0 + $0x24] sm:$0xf]
  %v24 = vld [vmem:[%s0 + $0x28] sm:$0xf]
  %v25 = vld [vmem:[%s0 + $0x2c] sm:$0xf]
  %v26 = vld [vmem:[%s0 + $0x30] sm:$0xf]
  %v27 = vld [vmem:[%s0 + $0x34] sm:$0xf]
  %v28 = vld [vmem:[%s0 + $0x38] sm:$0xf]
  %v29 = vld [vmem:[%s0 + $0x3c] sm:$0xf]
  %v30 = vunpack.c.l.bf16 %v14
  %v31 = vunpack.c.l.bf16 %v15
  %v32 = vunpack.c.l.bf16 %v16
  %v33 = vunpack.c.l.bf16 %v17
  %v34 = vunpack.c.l.bf16 %v18
  %v35 = vunpack.c.l.bf16 %v19
  %v36 = vunpack.c.l.bf16 %v20
  %v37 = vunpack.c.l.bf16 %v21
  %v38 = vunpack.c.l.bf16 %v22
  %v39 = vunpack.c.l.bf16 %v23
  %v40 = vunpack.c.l.bf16 %v24
  %v41 = vunpack.c.l.bf16 %v25
  %v42 = vunpack.c.l.bf16 %v26
  %v43 = vunpack.c.l.bf16 %v27
  %v44 = vunpack.c.l.bf16 %v28
  %v45 = vunpack.c.l.bf16 %v29
  %v46 = vld [vmem:[%s1] sm:$0x1]
  %v48 = vlaneseq
  %v49 = vshrl.u32 %v48, 7
  %v50 = vsub.s32 0, %v49
  %v51 = vrot.slane %v46, %v50
  %v53 = vmul.f32 %v30, %v51
  %v54 = vmul.f32 %v31, %v51
  %v55 = vmul.f32 %v32, %v51
  %v56 = vmul.f32 %v33, %v51
  %v57 = vmul.f32 %v34, %v51
  %v58 = vmul.f32 %v35, %v51
  %v59 = vmul.f32 %v36, %v51
  %v60 = vmul.f32 %v37, %v51
  %v61 = vmul.f32 %v38, %v51
  %v62 = vmul.f32 %v39, %v51
  %v63 = vmul.f32 %v40, %v51
  %v64 = vmul.f32 %v41, %v51
  %v65 = vmul.f32 %v42, %v51
  %v66 = vmul.f32 %v43, %v51
  %v67 = vmul.f32 %v44, %v51
  %v68 = vmul.f32 %v45, %v51
  %v69 = vld [vmem:[%s2] sm:$0x1]
  %v71 = vlaneseq
  %v72 = vshrl.u32 %v71, 7
  %v73 = vsub.s32 0, %v72
  %v74 = vrot.slane %v69, %v73
  %v76 = vadd.f32 %v53, %v74
  %v77 = vadd.f32 %v54, %v74
  %v78 = vadd.f32 %v55, %v74
  %v79 = vadd.f32 %v56, %v74
  %v80 = vadd.f32 %v57, %v74
  %v81 = vadd.f32 %v58, %v74
  %v82 = vadd.f32 %v59, %v74
  %v83 = vadd.f32 %v60, %v74
  %v84 = vadd.f32 %v61, %v74
  %v85 = vadd.f32 %v62, %v74
  %v86 = vadd.f32 %v63, %v74
  %v87 = vadd.f32 %v64, %v74
  %v88 = vadd.f32 %v65, %v74
  %v89 = vadd.f32 %v66, %v74
  %v90 = vadd.f32 %v67, %v74
  %v91 = vadd.f32 %v68, %v74
  %v92 = vmax.f32 %v76, 0.0
  %v93 = vmax.f32 %v77, 0.0
  %v94 = vmax.f32 %v78, 0.0
  %v95 = vmax.f32 %v79, 0.0
  %v96 = vmax.f32 %v80, 0.0
  %v97 = vmax.f32 %v81, 0.0
  %v98 = vmax.f32 %v82, 0.0
  %v99 = vmax.f32 %v83, 0.0
  %v100 = vmax.f32 %v84, 0.0
  %v101 = vmax.f32 %v85, 0.0
  %v102 = vmax.f32 %v86, 0.0
  %v103 = vmax.f32 %v87, 0.0
  %v104 = vmax.f32 %v88, 0.0
  %v105 = vmax.f32 %v89, 0.0
  %v106 = vmax.f32 %v90, 0.0
  %v107 = vmax.f32 %v91, 0.0
  %v108 = vpack.c.bf16 %v93, %v92
  %v109 = vpack.c.bf16 %v95, %v94
  %v110 = vpack.c.bf16 %v97, %v96
  %v111 = vpack.c.bf16 %v99, %v98
  %v112 = vpack.c.bf16 %v101, %v100
  %v113 = vpack.c.bf16 %v103, %v102
  %v114 = vpack.c.bf16 %v105, %v104
  %v115 = vpack.c.bf16 %v107, %v106
  %v124 = vunpack.c.l.b16 %v108
  %v125 = vunpack.c.h.b16 %v108
  %v126 = vunpack.c.l.b16 %v109
  %v127 = vunpack.c.h.b16 %v109
  %v128 = vunpack.c.l.b16 %v110
  %v129 = vunpack.c.h.b16 %v110
  %v130 = vunpack.c.l.b16 %v111
  %v131 = vunpack.c.h.b16 %v111
  %v132 = vunpack.c.l.b16 %v112
  %v133 = vunpack.c.h.b16 %v112
  %v134 = vunpack.c.l.b16 %v113
  %v135 = vunpack.c.h.b16 %v113
  %v136 = vunpack.c.l.b16 %v114
  %v137 = vunpack.c.h.b16 %v114
  %v138 = vunpack.c.l.b16 %v115
  %v139 = vunpack.c.h.b16 %v115
  %v140 = vpack.c.b16 %v124, %v124
  %v141 = vpack.c.b16 %v125, %v125
  %v142 = vpack.c.b16 %v126, %v126
  %v143 = vpack.c.b16 %v127, %v127
  %v144 = vpack.c.b16 %v128, %v128
  %v145 = vpack.c.b16 %v129, %v129
  %v146 = vpack.c.b16 %v130, %v130
  %v147 = vpack.c.b16 %v131, %v131
  %v148 = vpack.c.b16 %v132, %v132
  %v149 = vpack.c.b16 %v133, %v133
  %v150 = vpack.c.b16 %v134, %v134
  %v151 = vpack.c.b16 %v135, %v135
  %v152 = vpack.c.b16 %v136, %v136
  %v153 = vpack.c.b16 %v137, %v137
  %v154 = vpack.c.b16 %v138, %v138
  %v155 = vpack.c.b16 %v139, %v139
  %vm172 = vcmask 60416
  %173 = vst.msk [vmem:[%s3] sm:$0xf] %vm172, %v140
  %174 = vst.msk [vmem:[%s3 + $0x4] sm:$0xf] %vm172, %v141
  %175 = vst.msk [vmem:[%s3 + $0x8] sm:$0xf] %vm172, %v142
  %176 = vst.msk [vmem:[%s3 + $0xc] sm:$0xf] %vm172, %v143
  %177 = vst.msk [vmem:[%s3 + $0x10] sm:$0xf] %vm172, %v144
  %178 = vst.msk [vmem:[%s3 + $0x14] sm:$0xf] %vm172, %v145
  %179 = vst.msk [vmem:[%s3 + $0x18] sm:$0xf] %vm172, %v146
  %180 = vst.msk [vmem:[%s3 + $0x1c] sm:$0xf] %vm172, %v147
  %181 = vst.msk [vmem:[%s3 + $0x20] sm:$0xf] %vm172, %v148
  %182 = vst.msk [vmem:[%s3 + $0x24] sm:$0xf] %vm172, %v149
  %183 = vst.msk [vmem:[%s3 + $0x28] sm:$0xf] %vm172, %v150
  %184 = vst.msk [vmem:[%s3 + $0x2c] sm:$0xf] %vm172, %v151
  %185 = vst.msk [vmem:[%s3 + $0x30] sm:$0xf] %vm172, %v152
  %186 = vst.msk [vmem:[%s3 + $0x34] sm:$0xf] %vm172, %v153
  %187 = vst.msk [vmem:[%s3 + $0x38] sm:$0xf] %vm172, %v154
  %188 = vst.msk [vmem:[%s3 + $0x3c] sm:$0xf] %vm172, %v155
  // Predicated region
  $region14: #{basic_block_forward.5} parent=0 // pred_check
    _
  $region15: #{basic_block_forward.5} parent=0 // pred_check_branch
    %190 = sbr.rel (0) target = $region17
  $region16: #{basic_block_forward.5} parent=0 // pred_region
    _
  $region17: #{basic_block_forward.5} parent=0 // pred_fallthru
    _
  // Predicated region
  $region18: #{basic_block_forward.5} parent=0 // pred_check
    _
  $region19: #{basic_block_forward.5} parent=0 // pred_check_branch
    %192 = sbr.rel (0) target = $region21
  $region20: #{basic_block_forward.5} parent=0 // pred_region
    _
  $region21: #{basic_block_forward.5} parent=0 // pred_fallthru
    _

// kernel: basic_block_forward.4
$region0: #{basic_block_forward.4}
  #allocation0 [shape = 'u32[]', space=smem, size = 0x4, offset = 0x4, fixed_abs, tag = 'smem constant byte address 0x4 - core index']
  #allocation1 [shape = 'u32[144,128]{1,0:T(1,128)}', space=vmem, size = 0x12000, scoped, tag = 'internal scratch']
  %s0 = inlined_call_operand.vmem [shape: bf16[128,36], index: 0, kind: input, shape index: {}]
  %s1 = inlined_call_operand.vmem [shape: bf16[36,8], index: 1, kind: input, shape index: {}]
  %s2 = inlined_call_operand.vmem [shape: bf16[128,4], index: 2, kind: input, shape index: {}]
  %s3 = inlined_call_operand.vmem [shape: bf16[4,8], index: 3, kind: input, shape index: {}]
  %s4 = inlined_call_operand.vmem [shape: bf16[128,8], index: 4, kind: output, shape index: {0}]
  %s5 = inlined_call_operand.vmem [shape: bf16[128,8], index: 5, kind: output, shape index: {1}]
  %s6 = inlined_call_operand.vmem [shape: f32[1,1,8], index: 6, kind: output, shape index: {2}]
  %s7 = inlined_call_operand.vmem [shape: f32[1,1,8], index: 7, kind: output, shape index: {3}]
  %s8 = inlined_call_operand.vmem [shape: f32[1,1,8], index: 8, kind: output, shape index: {4}]
  %s9 = inlined_call_operand.vmem [shape: f32[1,1,8], index: 9, kind: output, shape index: {5}]
  %10 = xla_tuple %s4, %s5, %s6, %s7, %s8, %s9
  %s11 = sld [smem:[#allocation0]]
  $region66: #{basic_block_forward.4} parent=0
    _
  %s13 = ssub.s32 1, %s11
  %s14 = scalar_select 0, %s13, %s11
  // Predicated region
  $region2: #{basic_block_forward.4} parent=0 // pred_check
    _
  $region3: #{basic_block_forward.4} parent=0 // pred_check_branch
    %16 = sbr.rel (0) target = $region5
  $region4: #{basic_block_forward.4} parent=0 // pred_region
    _
  $region5: #{basic_block_forward.4} parent=0 // pred_fallthru
    _
  // Predicated region
  $region6: #{basic_block_forward.4} parent=0 // pred_check
    _
  $region7: #{basic_block_forward.4} parent=0 // pred_check_branch
    %18 = sbr.rel (0) target = $region9
  $region8: #{basic_block_forward.4} parent=0 // pred_region
    _
  $region9: #{basic_block_forward.4} parent=0 // pred_fallthru
    _
  // Predicated region
  $region10: #{basic_block_forward.4} parent=0 // pred_check
    _
  $region11: #{basic_block_forward.4} parent=0 // pred_check_branch
    %20 = sbr.rel (0) target = $region13
  $region12: #{basic_block_forward.4} parent=0 // pred_region
    _
  $region13: #{basic_block_forward.4} parent=0 // pred_fallthru
    _
  // Predicated region
  $region14: #{basic_block_forward.4} parent=0 // pred_check
    _
  $region15: #{basic_block_forward.4} parent=0 // pred_check_branch
    %22 = sbr.rel (0) target = $region17
  $region16: #{basic_block_forward.4} parent=0 // pred_region
    _
  $region17: #{basic_block_forward.4} parent=0 // pred_fallthru
    _
  %v24 = vld [vmem:[%s0] sm:$0xf]
  %v25 = vld [vmem:[%s0 + $0x4] sm:$0xf]
  %v26 = vld [vmem:[%s0 + $0x8] sm:$0xf]
  %v27 = vld [vmem:[%s0 + $0xc] sm:$0xf]
  %v28 = vld [vmem:[%s0 + $0x10] sm:$0xf]
  %v29 = vld [vmem:[%s0 + $0x14] sm:$0xf]
  %v30 = vld [vmem:[%s0 + $0x18] sm:$0xf]
  %v31 = vld [vmem:[%s0 + $0x1c] sm:$0xf]
  %v32 = vld [vmem:[%s0 + $0x20] sm:$0xf]
  %v33 = vld [vmem:[%s0 + $0x24] sm:$0xf]
  %v34 = vld [vmem:[%s0 + $0x28] sm:$0xf]
  %v35 = vld [vmem:[%s0 + $0x2c] sm:$0xf]
  %v36 = vld [vmem:[%s0 + $0x30] sm:$0xf]
  %v37 = vld [vmem:[%s0 + $0x34] sm:$0xf]
  %v38 = vld [vmem:[%s0 + $0x38] sm:$0xf]
  %v39 = vld [vmem:[%s0 + $0x3c] sm:$0xf]
  %v40 = vld [vmem:[%s1] sm:$0xf]
  %v41 = vld [vmem:[%s1 + $0x4] sm:$0xf]
  %v42 = vld [vmem:[%s1 + $0x8] sm:$0xf]
  %v43 = vld [vmem:[%s1 + $0xc] sm:$0xf]
  %v44 = vld [vmem:[%s1 + $0x10] sm:$0x3]
  %v61 = vunpack.c.l.b16 %v24
  %v62 = vunpack.c.l.b16 %v25
  %v63 = vunpack.c.l.b16 %v26
  %v64 = vunpack.c.l.b16 %v27
  %v65 = vunpack.c.l.b16 %v28
  %v66 = vunpack.c.l.b16 %v29
  %v67 = vunpack.c.l.b16 %v30
  %v68 = vunpack.c.l.b16 %v31
  %v69 = vunpack.c.l.b16 %v32
  %v70 = vunpack.c.l.b16 %v33
  %v71 = vunpack.c.l.b16 %v34
  %v72 = vunpack.c.l.b16 %v35
  %v73 = vunpack.c.l.b16 %v36
  %v74 = vunpack.c.l.b16 %v37
  %v75 = vunpack.c.l.b16 %v38
  %v76 = vunpack.c.l.b16 %v39
  %v77 = vpack.c.b16 %v62, %v61
  %v78 = vpack.c.b16 %v64, %v63
  %v79 = vpack.c.b16 %v66, %v65
  %v80 = vpack.c.b16 %v68, %v67
  %v81 = vpack.c.b16 %v70, %v69
  %v82 = vpack.c.b16 %v72, %v71
  %v83 = vpack.c.b16 %v74, %v73
  %v84 = vpack.c.b16 %v76, %v75
  %v90 = vunpack.c.l.b16 %v40
  %v91 = vunpack.c.l.b16 %v41
  %v92 = vunpack.c.l.b16 %v42
  %v93 = vunpack.c.l.b16 %v43
  %v94 = vunpack.c.l.b16 %v44
  %v95 = vpack.c.b16 %v91, %v90
  %v96 = vpack.c.b16 %v93, %v92
  %v97 = vpack.c.b16 %v94, %v94
  %vm100 = vcmask 293888
  %v102 = vsel %vm100, %v77, 0
  %v105 = vsel %vm100, %v78, 0
  %v108 = vsel %vm100, %v79, 0
  %v111 = vsel %vm100, %v80, 0
  %v114 = vsel %vm100, %v81, 0
  %v117 = vsel %vm100, %v82, 0
  %v120 = vsel %vm100, %v83, 0
  %v123 = vsel %vm100, %v84, 0
  %vm125 = vcmask 1041408
  %v127 = vsel %vm125, %v97, 0
  %129 = vmatprep.subr.bf16.mxu0 0
  %130 = vmatpush1.bf16.msra.mxu0 0
  %131 = vmatprep.subr.bf16.mxu0 0
  %132 = vmatpush1.bf16.msra.mxu0 0
  %133 = vmatprep.subr.bf16.mxu0 0
  %134 = vmatpush1.bf16.msra.mxu0 0
  %135 = vmatprep.subr.bf16.mxu0 0
  %136 = vmatpush1.bf16.msra.mxu0 0
  %137 = vmatprep.subr.bf16.mxu0 0
  %138 = vmatpush1.bf16.msra.mxu0 0
  %139 = vmatprep.subr.bf16.mxu0 0
  %140 = vmatpush1.bf16.msra.mxu0 %v127
  %141 = vmatprep.subr.bf16.mxu0 0
  %142 = vmatpush1.bf16.msra.mxu0 %v96
  %143 = vmatprep.subr.bf16.mxu0 0
  %144 = vmatpush1.bf16.msra.mxu0 %v95
  %145 = vmatprep.subr.bf16.mxu0 0
  %146 = vmatpush2.bf16.msra.mxu0 0
  %147 = vmatprep.subr.bf16.mxu0 0
  %148 = vmatpush2.bf16.msra.mxu0 0
  %149 = vmatprep.subr.bf16.mxu0 0
  %150 = vmatpush2.bf16.msra.mxu0 0
  %151 = vmatprep.subr.bf16.mxu0 0
  %152 = vmatpush2.bf16.msra.mxu0 0
  %153 = vmatprep.subr.bf16.mxu0 0
  %154 = vmatpush2.bf16.msra.mxu0 0
  %155 = vmatprep.subr.bf16.mxu0 0
  %156 = vmatpush2.bf16.msra.mxu0 0
  %157 = vmatprep.subr.bf16.mxu0 0
  %158 = vmatpush2.bf16.msra.mxu0 0
  %159 = vmatprep.subr.bf16.mxu0 0
  %160 = vmatpush2.bf16.msra.mxu0 0
  %161 = vmatprep.mubr.bf16.mxu0 0
  %162 = vmatmul.mubr.bf16.gmra.mxu0 %v102
  %v163 = vpop.f32.mrf.mxu0
  %v164 = vadd.f32 0.0, %v163
  %v165 = vpop.f32.mrf.mxu0
  %v166 = vpop.f32.mrf.mxu0
  %v167 = vadd.f32 0.0, %v166
  %v168 = vpop.f32.mrf.mxu0
  %169 = vmatprep.mubr.bf16.mxu0 0
  %170 = vmatmul.mubr.bf16.gmra.mxu0 %v105
  %v171 = vpop.f32.mrf.mxu0
  %v172 = vadd.f32 0.0, %v171
  %v173 = vpop.f32.mrf.mxu0
  %v174 = vpop.f32.mrf.mxu0
  %v175 = vadd.f32 0.0, %v174
  %v176 = vpop.f32.mrf.mxu0
  %177 = vmatprep.mubr.bf16.mxu0 0
  %178 = vmatmul.mubr.bf16.gmra.mxu0 %v108
  %v179 = vpop.f32.mrf.mxu0
  %v180 = vadd.f32 0.0, %v179
  %v181 = vpop.f32.mrf.mxu0
  %v182 = vpop.f32.mrf.mxu0
  %v183 = vadd.f32 0.0, %v182
  %v184 = vpop.f32.mrf.mxu0
  %185 = vmatprep.mubr.bf16.mxu0 0
  %186 = vmatmul.mubr.bf16.gmra.mxu0 %v111
  %v187 = vpop.f32.mrf.mxu0
  %v188 = vadd.f32 0.0, %v187
  %v189 = vpop.f32.mrf.mxu0
  %v190 = vpop.f32.mrf.mxu0
  %v191 = vadd.f32 0.0, %v190
  %v192 = vpop.f32.mrf.mxu0
  %193 = vmatprep.mubr.bf16.mxu0 0
  %194 = vmatmul.mubr.bf16.gmra.mxu0 %v114
  %v195 = vpop.f32.mrf.mxu0
  %v196 = vadd.f32 0.0, %v195
  %v197 = vpop.f32.mrf.mxu0
  %v198 = vpop.f32.mrf.mxu0
  %v199 = vadd.f32 0.0, %v198
  %v200 = vpop.f32.mrf.mxu0
  %201 = vmatprep.mubr.bf16.mxu0 0
  %202 = vmatmul.mubr.bf16.gmra.mxu0 %v117
  %v203 = vpop.f32.mrf.mxu0
  %v204 = vadd.f32 0.0, %v203
  %v205 = vpop.f32.mrf.mxu0
  %v206 = vpop.f32.mrf.mxu0
  %v207 = vadd.f32 0.0, %v206
  %v208 = vpop.f32.mrf.mxu0
  %209 = vmatprep.mubr.bf16.mxu0 0
  %210 = vmatmul.mubr.bf16.gmra.mxu0 %v120
  %v211 = vpop.f32.mrf.mxu0
  %v212 = vadd.f32 0.0, %v211
  %v213 = vpop.f32.mrf.mxu0
  %v214 = vpop.f32.mrf.mxu0
  %v215 = vadd.f32 0.0, %v214
  %v216 = vpop.f32.mrf.mxu0
  %217 = vmatprep.mubr.bf16.mxu0 0
  %218 = vmatmul.mubr.bf16.gmra.mxu0 %v123
  %v219 = vpop.f32.mrf.mxu0
  %v220 = vadd.f32 0.0, %v219
  %v221 = vpop.f32.mrf.mxu0
  %v222 = vpop.f32.mrf.mxu0
  %v223 = vadd.f32 0.0, %v222
  %v224 = vpop.f32.mrf.mxu0
  %225 = vdwg.mxu0
  %v226 = vld [vmem:[%s2] sm:$0xf]
  %v227 = vld [vmem:[%s2 + $0x4] sm:$0xf]
  %v228 = vld [vmem:[%s2 + $0x8] sm:$0xf]
  %v229 = vld [vmem:[%s2 + $0xc] sm:$0xf]
  %v230 = vld [vmem:[%s2 + $0x10] sm:$0xf]
  %v231 = vld [vmem:[%s2 + $0x14] sm:$0xf]
  %v232 = vld [vmem:[%s2 + $0x18] sm:$0xf]
  %v233 = vld [vmem:[%s2 + $0x1c] sm:$0xf]
  %v234 = vld [vmem:[%s2 + $0x20] sm:$0xf]
  %v235 = vld [vmem:[%s2 + $0x24] sm:$0xf]
  %v236 = vld [vmem:[%s2 + $0x28] sm:$0xf]
  %v237 = vld [vmem:[%s2 + $0x2c] sm:$0xf]
  %v238 = vld [vmem:[%s2 + $0x30] sm:$0xf]
  %v239 = vld [vmem:[%s2 + $0x34] sm:$0xf]
  %v240 = vld [vmem:[%s2 + $0x38] sm:$0xf]
  %v241 = vld [vmem:[%s2 + $0x3c] sm:$0xf]
  %v242 = vld [vmem:[%s3] sm:$0x3]
  %v259 = vunpack.c.l.b16 %v226
  %v260 = vunpack.c.l.b16 %v227
  %v261 = vunpack.c.l.b16 %v228
  %v262 = vunpack.c.l.b16 %v229
  %v263 = vunpack.c.l.b16 %v230
  %v264 = vunpack.c.l.b16 %v231
  %v265 = vunpack.c.l.b16 %v232
  %v266 = vunpack.c.l.b16 %v233
  %v267 = vunpack.c.l.b16 %v234
  %v268 = vunpack.c.l.b16 %v235
  %v269 = vunpack.c.l.b16 %v236
  %v270 = vunpack.c.l.b16 %v237
  %v271 = vunpack.c.l.b16 %v238
  %v272 = vunpack.c.l.b16 %v239
  %v273 = vunpack.c.l.b16 %v240
  %v274 = vunpack.c.l.b16 %v241
  %v275 = vpack.c.b16 %v260, %v259
  %v276 = vpack.c.b16 %v262, %v261
  %v277 = vpack.c.b16 %v264, %v263
  %v278 = vpack.c.b16 %v266, %v265
  %v279 = vpack.c.b16 %v268, %v267
  %v280 = vpack.c.b16 %v270, %v269
  %v281 = vpack.c.b16 %v272, %v271
  %v282 = vpack.c.b16 %v274, %v273
  %vm283 = vcmask 31744
  %v285 = vsel %vm283, %v275, 0
  %v288 = vsel %vm283, %v276, 0
  %v291 = vsel %vm283, %v277, 0
  %v294 = vsel %vm283, %v278, 0
  %v297 = vsel %vm283, %v279, 0
  %v300 = vsel %vm283, %v280, 0
  %v303 = vsel %vm283, %v281, 0
  %v306 = vsel %vm283, %v282, 0
  %v309 = vsel %vm125, %v242, 0
  %311 = vmatprep.subr.bf16.mxu0 0
  %312 = vmatpush1.bf16.msra.mxu0 0
  %313 = vmatprep.subr.bf16.mxu0 0
  %314 = vmatpush1.bf16.msra.mxu0 0
  %315 = vmatprep.subr.bf16.mxu0 0
  %316 = vmatpush1.bf16.msra.mxu0 0
  %317 = vmatprep.subr.bf16.mxu0 0
  %318 = vmatpush1.bf16.msra.mxu0 0
  %319 = vmatprep.subr.bf16.mxu0 0
  %320 = vmatpush1.bf16.msra.mxu0 0
  %321 = vmatprep.subr.bf16.mxu0 0
  %322 = vmatpush1.bf16.msra.mxu0 0
  %323 = vmatprep.subr.bf16.mxu0 0
  %324 = vmatpush1.bf16.msra.mxu0 0
  %325 = vmatprep.subr.bf16.mxu0 0
  %326 = vmatpush1.bf16.msra.mxu0 %v309
  %327 = vmatprep.subr.bf16.mxu0 0
  %328 = vmatpush2.bf16.msra.mxu0 0
  %329 = vmatprep.subr.bf16.mxu0 0
  %330 = vmatpush2.bf16.msra.mxu0 0
  %331 = vmatprep.subr.bf16.mxu0 0
  %332 = vmatpush2.bf16.msra.mxu0 0
  %333 = vmatprep.subr.bf16.mxu0 0
  %334 = vmatpush2.bf16.msra.mxu0 0
  %335 = vmatprep.subr.bf16.mxu0 0
  %336 = vmatpush2.bf16.msra.mxu0 0
  %337 = vmatprep.subr.bf16.mxu0 0
  %338 = vmatpush2.bf16.msra.mxu0 0
  %339 = vmatprep.subr.bf16.mxu0 0
  %340 = vmatpush2.bf16.msra.mxu0 0
  %341 = vmatprep.subr.bf16.mxu0 0
  %342 = vmatpush2.bf16.msra.mxu0 0
  %343 = vmatprep.mubr.bf16.mxu0 0
  %344 = vmatmul.mubr.bf16.gmra.mxu0 %v285
  %v345 = vpop.f32.mrf.mxu0
  %v346 = vadd.f32 0.0, %v345
  %v347 = vpop.f32.mrf.mxu0
  %v348 = vpop.f32.mrf.mxu0
  %v349 = vadd.f32 0.0, %v348
  %v350 = vpop.f32.mrf.mxu0
  %351 = vmatprep.mubr.bf16.mxu0 0
  %352 = vmatmul.mubr.bf16.gmra.mxu0 %v288
  %v353 = vpop.f32.mrf.mxu0
  %v354 = vadd.f32 0.0, %v353
  %v355 = vpop.f32.mrf.mxu0
  %v356 = vpop.f32.mrf.mxu0
  %v357 = vadd.f32 0.0, %v356
  %v358 = vpop.f32.mrf.mxu0
  %359 = vmatprep.mubr.bf16.mxu0 0
  %360 = vmatmul.mubr.bf16.gmra.mxu0 %v291
  %v361 = vpop.f32.mrf.mxu0
  %v362 = vadd.f32 0.0, %v361
  %v363 = vpop.f32.mrf.mxu0
  %v364 = vpop.f32.mrf.mxu0
  %v365 = vadd.f32 0.0, %v364
  %v366 = vpop.f32.mrf.mxu0
  %367 = vmatprep.mubr.bf16.mxu0 0
  %368 = vmatmul.mubr.bf16.gmra.mxu0 %v294
  %v369 = vpop.f32.mrf.mxu0
  %v370 = vadd.f32 0.0, %v369
  %v371 = vpop.f32.mrf.mxu0
  %v372 = vpop.f32.mrf.mxu0
  %v373 = vadd.f32 0.0, %v372
  %v374 = vpop.f32.mrf.mxu0
  %375 = vmatprep.mubr.bf16.mxu0 0
  %376 = vmatmul.mubr.bf16.gmra.mxu0 %v297
  %v377 = vpop.f32.mrf.mxu0
  %v378 = vadd.f32 0.0, %v377
  %v379 = vpop.f32.mrf.mxu0
  %v380 = vpop.f32.mrf.mxu0
  %v381 = vadd.f32 0.0, %v380
  %v382 = vpop.f32.mrf.mxu0
  %383 = vmatprep.mubr.bf16.mxu0 0
  %384 = vmatmul.mubr.bf16.gmra.mxu0 %v300
  %v385 = vpop.f32.mrf.mxu0
  %v386 = vadd.f32 0.0, %v385
  %v387 = vpop.f32.mrf.mxu0
  %v388 = vpop.f32.mrf.mxu0
  %v389 = vadd.f32 0.0, %v388
  %v390 = vpop.f32.mrf.mxu0
  %391 = vmatprep.mubr.bf16.mxu0 0
  %392 = vmatmul.mubr.bf16.gmra.mxu0 %v303
  %v393 = vpop.f32.mrf.mxu0
  %v394 = vadd.f32 0.0, %v393
  %v395 = vpop.f32.mrf.mxu0
  %v396 = vpop.f32.mrf.mxu0
  %v397 = vadd.f32 0.0, %v396
  %v398 = vpop.f32.mrf.mxu0
  %399 = vmatprep.mubr.bf16.mxu0 0
  %400 = vmatmul.mubr.bf16.gmra.mxu0 %v306
  %v401 = vpop.f32.mrf.mxu0
  %v402 = vadd.f32 0.0, %v401
  %v403 = vpop.f32.mrf.mxu0
  %v404 = vpop.f32.mrf.mxu0
  %v405 = vadd.f32 0.0, %v404
  %v406 = vpop.f32.mrf.mxu0
  %407 = vdwg.mxu0
  %v408 = vpack.c.bf16 %v167, %v164
  %v409 = vpack.c.bf16 %v175, %v172
  %v410 = vpack.c.bf16 %v183, %v180
  %v411 = vpack.c.bf16 %v191, %v188
  %v412 = vpack.c.bf16 %v199, %v196
  %v413 = vpack.c.bf16 %v207, %v204
  %v414 = vpack.c.bf16 %v215, %v212
  %v415 = vpack.c.bf16 %v223, %v220
  %v424 = vunpack.c.l.b16 %v408
  %v425 = vunpack.c.h.b16 %v408
  %v426 = vunpack.c.l.b16 %v409
  %v427 = vunpack.c.h.b16 %v409
  %v428 = vunpack.c.l.b16 %v410
  %v429 = vunpack.c.h.b16 %v410
  %v430 = vunpack.c.l.b16 %v411
  %v431 = vunpack.c.h.b16 %v411
  %v432 = vunpack.c.l.b16 %v412
  %v433 = vunpack.c.h.b16 %v412
  %v434 = vunpack.c.l.b16 %v413
  %v435 = vunpack.c.h.b16 %v413
  %v436 = vunpack.c.l.b16 %v414
  %v437 = vunpack.c.h.b16 %v414
  %v438 = vunpack.c.l.b16 %v415
  %v439 = vunpack.c.h.b16 %v415
  %v440 = vpack.c.b16 %v424, %v424
  %v441 = vpack.c.b16 %v425, %v425
  %v442 = vpack.c.b16 %v426, %v426
  %v443 = vpack.c.b16 %v427, %v427
  %v444 = vpack.c.b16 %v428, %v428
  %v445 = vpack.c.b16 %v429, %v429
  %v446 = vpack.c.b16 %v430, %v430
  %v447 = vpack.c.b16 %v431, %v431
  %v448 = vpack.c.b16 %v432, %v432
  %v449 = vpack.c.b16 %v433, %v433
  %v450 = vpack.c.b16 %v434, %v434
  %v451 = vpack.c.b16 %v435, %v435
  %v452 = vpack.c.b16 %v436, %v436
  %v453 = vpack.c.b16 %v437, %v437
  %v454 = vpack.c.b16 %v438, %v438
  %v455 = vpack.c.b16 %v439, %v439
  %vm472 = vcmask 60416
  %473 = vst.msk [vmem:[%s4] sm:$0xf] %vm472, %v440
  %474 = vst.msk [vmem:[%s4 + $0x4] sm:$0xf] %vm472, %v441
  %475 = vst.msk [vmem:[%s4 + $0x8] sm:$0xf] %vm472, %v442
  %476 = vst.msk [vmem:[%s4 + $0xc] sm:$0xf] %vm472, %v443
  %477 = vst.msk [vmem:[%s4 + $0x10] sm:$0xf] %vm472, %v444
  %478 = vst.msk [vmem:[%s4 + $0x14] sm:$0xf] %vm472, %v445
  %479 = vst.msk [vmem:[%s4 + $0x18] sm:$0xf] %vm472, %v446
  %480 = vst.msk [vmem:[%s4 + $0x1c] sm:$0xf] %vm472, %v447
  %481 = vst.msk [vmem:[%s4 + $0x20] sm:$0xf] %vm472, %v448
  %482 = vst.msk [vmem:[%s4 + $0x24] sm:$0xf] %vm472, %v449
  %483 = vst.msk [vmem:[%s4 + $0x28] sm:$0xf] %vm472, %v450
  %484 = vst.msk [vmem:[%s4 + $0x2c] sm:$0xf] %vm472, %v451
  %485 = vst.msk [vmem:[%s4 + $0x30] sm:$0xf] %vm472, %v452
  %486 = vst.msk [vmem:[%s4 + $0x34] sm:$0xf] %vm472, %v453
  %487 = vst.msk [vmem:[%s4 + $0x38] sm:$0xf] %vm472, %v454
  %488 = vst.msk [vmem:[%s4 + $0x3c] sm:$0xf] %vm472, %v455
  %v489 = vpack.c.bf16 %v349, %v346
  %v490 = vpack.c.bf16 %v357, %v354
  %v491 = vpack.c.bf16 %v365, %v362
  %v492 = vpack.c.bf16 %v373, %v370
  %v493 = vpack.c.bf16 %v381, %v378
  %v494 = vpack.c.bf16 %v389, %v386
  %v495 = vpack.c.bf16 %v397, %v394
  %v496 = vpack.c.bf16 %v405, %v402
  %v505 = vunpack.c.l.b16 %v489
  %v506 = vunpack.c.h.b16 %v489
  %v507 = vunpack.c.l.b16 %v490
  %v508 = vunpack.c.h.b16 %v490
  %v509 = vunpack.c.l.b16 %v491
  %v510 = vunpack.c.h.b16 %v491
  %v511 = vunpack.c.l.b16 %v492
  %v512 = vunpack.c.h.b16 %v492
  %v513 = vunpack.c.l.b16 %v493
  %v514 = vunpack.c.h.b16 %v493
  %v515 = vunpack.c.l.b16 %v494
  %v516 = vunpack.c.h.b16 %v494
  %v517 = vunpack.c.l.b16 %v495
  %v518 = vunpack.c.h.b16 %v495
  %v519 = vunpack.c.l.b16 %v496
  %v520 = vunpack.c.h.b16 %v496
  %v521 = vpack.c.b16 %v505, %v505
  %v522 = vpack.c.b16 %v506, %v506
  %v523 = vpack.c.b16 %v507, %v507
  %v524 = vpack.c.b16 %v508, %v508
  %v525 = vpack.c.b16 %v509, %v509
  %v526 = vpack.c.b16 %v510, %v510
  %v527 = vpack.c.b16 %v511, %v511
  %v528 = vpack.c.b16 %v512, %v512
  %v529 = vpack.c.b16 %v513, %v513
  %v530 = vpack.c.b16 %v514, %v514
  %v531 = vpack.c.b16 %v515, %v515
  %v532 = vpack.c.b16 %v516, %v516
  %v533 = vpack.c.b16 %v517, %v517
  %v534 = vpack.c.b16 %v518, %v518
  %v535 = vpack.c.b16 %v519, %v519
  %v536 = vpack.c.b16 %v520, %v520
  %553 = vst.msk [vmem:[%s5] sm:$0xf] %vm472, %v521
  %554 = vst.msk [vmem:[%s5 + $0x4] sm:$0xf] %vm472, %v522
  %555 = vst.msk [vmem:[%s5 + $0x8] sm:$0xf] %vm472, %v523
  %556 = vst.msk [vmem:[%s5 + $0xc] sm:$0xf] %vm472, %v524
  %557 = vst.msk [vmem:[%s5 + $0x10] sm:$0xf] %vm472, %v525
  %558 = vst.msk [vmem:[%s5 + $0x14] sm:$0xf] %vm472, %v526
  %559 = vst.msk [vmem:[%s5 + $0x18] sm:$0xf] %vm472, %v527
  %560 = vst.msk [vmem:[%s5 + $0x1c] sm:$0xf] %vm472, %v528
  %561 = vst.msk [vmem:[%s5 + $0x20] sm:$0xf] %vm472, %v529
  %562 = vst.msk [vmem:[%s5 + $0x24] sm:$0xf] %vm472, %v530
  %563 = vst.msk [vmem:[%s5 + $0x28] sm:$0xf] %vm472, %v531
  %564 = vst.msk [vmem:[%s5 + $0x2c] sm:$0xf] %vm472, %v532
  %565 = vst.msk [vmem:[%s5 + $0x30] sm:$0xf] %vm472, %v533
  %566 = vst.msk [vmem:[%s5 + $0x34] sm:$0xf] %vm472, %v534
  %567 = vst.msk [vmem:[%s5 + $0x38] sm:$0xf] %vm472, %v535
  %568 = vst.msk [vmem:[%s5 + $0x3c] sm:$0xf] %vm472, %v536
  %vm569 = vcmask 64512
  %v570 = vsel %vm569, %v164, 0.0
  %v571 = vsel %vm569, %v167, 0.0
  %v572 = vadd.f32 %v570, %v571
  %v573 = vsel %vm569, %v172, 0.0
  %v574 = vadd.f32 %v572, %v573
  %v575 = vsel %vm569, %v175, 0.0
  %v576 = vadd.f32 %v574, %v575
  %v577 = vsel %vm569, %v180, 0.0
  %v578 = vadd.f32 %v576, %v577
  %v579 = vsel %vm569, %v183, 0.0
  %v580 = vadd.f32 %v578, %v579
  %v581 = vsel %vm569, %v188, 0.0
  %v582 = vadd.f32 %v580, %v581
  %v583 = vsel %vm569, %v191, 0.0
  %v584 = vadd.f32 %v582, %v583
  %v585 = vsel %vm569, %v196, 0.0
  %v586 = vadd.f32 %v584, %v585
  %v587 = vsel %vm569, %v199, 0.0
  %v588 = vadd.f32 %v586, %v587
  %v589 = vsel %vm569, %v204, 0.0
  %v590 = vadd.f32 %v588, %v589
  %v591 = vsel %vm569, %v207, 0.0
  %v592 = vadd.f32 %v590, %v591
  %v593 = vsel %vm569, %v212, 0.0
  %v594 = vadd.f32 %v592, %v593
  %v595 = vsel %vm569, %v215, 0.0
  %v596 = vadd.f32 %v594, %v595
  %v597 = vsel %vm569, %v220, 0.0
  %v598 = vadd.f32 %v596, %v597
  %v599 = vsel %vm569, %v223, 0.0
  %v600 = vadd.f32 %v598, %v599
  %v601 = vrot.slane %v600, 4
  %v602 = vadd.f32 %v600, %v601
  %v603 = vrot.slane %v602, 2
  %v604 = vadd.f32 %v602, %v603
  %v605 = vrot.slane %v604, 1
  %v606 = vadd.f32 %v604, %v605
  %vm607 = vcmask 57344
  %608 = vst.msk [vmem:[%s6] sm:$0x1] %vm607, %v606
  %v609 = vmul.f32 %v164, %v164
  %v610 = vmul.f32 %v167, %v167
  %v611 = vmul.f32 %v172, %v172
  %v612 = vmul.f32 %v175, %v175
  %v613 = vmul.f32 %v180, %v180
  %v614 = vmul.f32 %v183, %v183
  %v615 = vmul.f32 %v188, %v188
  %v616 = vmul.f32 %v191, %v191
  %v617 = vmul.f32 %v196, %v196
  %v618 = vmul.f32 %v199, %v199
  %v619 = vmul.f32 %v204, %v204
  %v620 = vmul.f32 %v207, %v207
  %v621 = vmul.f32 %v212, %v212
  %v622 = vmul.f32 %v215, %v215
  %v623 = vmul.f32 %v220, %v220
  %v624 = vmul.f32 %v223, %v223
  %v625 = vsel %vm569, %v609, 0.0
  %v626 = vsel %vm569, %v610, 0.0
  %v627 = vadd.f32 %v625, %v626
  %v628 = vsel %vm569, %v611, 0.0
  %v629 = vadd.f32 %v627, %v628
  %v630 = vsel %vm569, %v612, 0.0
  %v631 = vadd.f32 %v629, %v630
  %v632 = vsel %vm569, %v613, 0.0
  %v633 = vadd.f32 %v631, %v632
  %v634 = vsel %vm569, %v614, 0.0
  %v635 = vadd.f32 %v633, %v634
  %v636 = vsel %vm569, %v615, 0.0
  %v637 = vadd.f32 %v635, %v636
  %v638 = vsel %vm569, %v616, 0.0
  %v639 = vadd.f32 %v637, %v638
  %v640 = vsel %vm569, %v617, 0.0
  %v641 = vadd.f32 %v639, %v640
  %v642 = vsel %vm569, %v618, 0.0
  %v643 = vadd.f32 %v641, %v642
  %v644 = vsel %vm569, %v619, 0.0
  %v645 = vadd.f32 %v643, %v644
  %v646 = vsel %vm569, %v620, 0.0
  %v647 = vadd.f32 %v645, %v646
  %v648 = vsel %vm569, %v621, 0.0
  %v649 = vadd.f32 %v647, %v648
  %v650 = vsel %vm569, %v622, 0.0
  %v651 = vadd.f32 %v649, %v650
  %v652 = vsel %vm569, %v623, 0.0
  %v653 = vadd.f32 %v651, %v652
  %v654 = vsel %vm569, %v624, 0.0
  %v655 = vadd.f32 %v653, %v654
  %v656 = vrot.slane %v655, 4
  %v657 = vadd.f32 %v655, %v656
  %v658 = vrot.slane %v657, 2
  %v659 = vadd.f32 %v657, %v658
  %v660 = vrot.slane %v659, 1
  %v661 = vadd.f32 %v659, %v660
  %662 = vst.msk [vmem:[%s7] sm:$0x1] %vm607, %v661
  %v663 = vsel %vm569, %v346, 0.0
  %v664 = vsel %vm569, %v349, 0.0
  %v665 = vadd.f32 %v663, %v664
  %v666 = vsel %vm569, %v354, 0.0
  %v667 = vadd.f32 %v665, %v666
  %v668 = vsel %vm569, %v357, 0.0
  %v669 = vadd.f32 %v667, %v668
  %v670 = vsel %vm569, %v362, 0.0
  %v671 = vadd.f32 %v669, %v670
  %v672 = vsel %vm569, %v365, 0.0
  %v673 = vadd.f32 %v671, %v672
  %v674 = vsel %vm569, %v370, 0.0
  %v675 = vadd.f32 %v673, %v674
  %v676 = vsel %vm569, %v373, 0.0
  %v677 = vadd.f32 %v675, %v676
  %v678 = vsel %vm569, %v378, 0.0
  %v679 = vadd.f32 %v677, %v678
  %v680 = vsel %vm569, %v381, 0.0
  %v681 = vadd.f32 %v679, %v680
  %v682 = vsel %vm569, %v386, 0.0
  %v683 = vadd.f32 %v681, %v682
  %v684 = vsel %vm569, %v389, 0.0
  %v685 = vadd.f32 %v683, %v684
  %v686 = vsel %vm569, %v394, 0.0
  %v687 = vadd.f32 %v685, %v686
  %v688 = vsel %vm569, %v397, 0.0
  %v689 = vadd.f32 %v687, %v688
  %v690 = vsel %vm569, %v402, 0.0
  %v691 = vadd.f32 %v689, %v690
  %v692 = vsel %vm569, %v405, 0.0
  %v693 = vadd.f32 %v691, %v692
  %v694 = vrot.slane %v693, 4
  %v695 = vadd.f32 %v693, %v694
  %v696 = vrot.slane %v695, 2
  %v697 = vadd.f32 %v695, %v696
  %v698 = vrot.slane %v697, 1
  %v699 = vadd.f32 %v697, %v698
  %700 = vst.msk [vmem:[%s8] sm:$0x1] %vm607, %v699
  %v701 = vmul.f32 %v346, %v346
  %v702 = vmul.f32 %v349, %v349
  %v703 = vmul.f32 %v354, %v354
  %v704 = vmul.f32 %v357, %v357
  %v705 = vmul.f32 %v362, %v362
  %v706 = vmul.f32 %v365, %v365
  %v707 = vmul.f32 %v370, %v370
  %v708 = vmul.f32 %v373, %v373
  %v709 = vmul.f32 %v378, %v378
  %v710 = vmul.f32 %v381, %v381
  %v711 = vmul.f32 %v386, %v386
  %v712 = vmul.f32 %v389, %v389
  %v713 = vmul.f32 %v394, %v394
  %v714 = vmul.f32 %v397, %v397
  %v715 = vmul.f32 %v402, %v402
  %v716 = vmul.f32 %v405, %v405
  %v717 = vsel %vm569, %v701, 0.0
  %v718 = vsel %vm569, %v702, 0.0
  %v719 = vadd.f32 %v717, %v718
  %v720 = vsel %vm569, %v703, 0.0
  %v721 = vadd.f32 %v719, %v720
  %v722 = vsel %vm569, %v704, 0.0
  %v723 = vadd.f32 %v721, %v722
  %v724 = vsel %vm569, %v705, 0.0
  %v725 = vadd.f32 %v723, %v724
  %v726 = vsel %vm569, %v706, 0.0
  %v727 = vadd.f32 %v725, %v726
  %v728 = vsel %vm569, %v707, 0.0
  %v729 = vadd.f32 %v727, %v728
  %v730 = vsel %vm569, %v708, 0.0
  %v731 = vadd.f32 %v729, %v730
  %v732 = vsel %vm569, %v709, 0.0
  %v733 = vadd.f32 %v731, %v732
  %v734 = vsel %vm569, %v710, 0.0
  %v735 = vadd.f32 %v733, %v734
  %v736 = vsel %vm569, %v711, 0.0
  %v737 = vadd.f32 %v735, %v736
  %v738 = vsel %vm569, %v712, 0.0
  %v739 = vadd.f32 %v737, %v738
  %v740 = vsel %vm569, %v713, 0.0
  %v741 = vadd.f32 %v739, %v740
  %v742 = vsel %vm569, %v714, 0.0
  %v743 = vadd.f32 %v741, %v742
  %v744 = vsel %vm569, %v715, 0.0
  %v745 = vadd.f32 %v743, %v744
  %v746 = vsel %vm569, %v716, 0.0
  %v747 = vadd.f32 %v745, %v746
  %v748 = vrot.slane %v747, 4
  %v749 = vadd.f32 %v747, %v748
  %v750 = vrot.slane %v749, 2
  %v751 = vadd.f32 %v749, %v750
  %v752 = vrot.slane %v751, 1
  %v753 = vadd.f32 %v751, %v752
  %754 = vst.msk [vmem:[%s9] sm:$0x1] %vm607, %v753
  // Predicated region
  $region18: #{basic_block_forward.4} parent=0 // pred_check
    _
  $region19: #{basic_block_forward.4} parent=0 // pred_check_branch
    %756 = sbr.rel (0) target = $region21
  $region20: #{basic_block_forward.4} parent=0 // pred_region
    _
  $region21: #{basic_block_forward.4} parent=0 // pred_fallthru
    _
  // Predicated region
  $region22: #{basic_block_forward.4} parent=0 // pred_check
    _
  $region23: #{basic_block_forward.4} parent=0 // pred_check_branch
    %758 = sbr.rel (0) target = $region25
  $region24: #{basic_block_forward.4} parent=0 // pred_region
    _
  $region25: #{basic_block_forward.4} parent=0 // pred_fallthru
    _
  // Predicated region
  $region26: #{basic_block_forward.4} parent=0 // pred_check
    _
  $region27: #{basic_block_forward.4} parent=0 // pred_check_branch
    %760 = sbr.rel (0) target = $region29
  $region28: #{basic_block_forward.4} parent=0 // pred_region
    _
  $region29: #{basic_block_forward.4} parent=0 // pred_fallthru
    _
  // Predicated region
  $region30: #{basic_block_forward.4} parent=0 // pred_check
    _
  $region31: #{basic_block_forward.4} parent=0 // pred_check_branch
    %762 = sbr.rel (0) target = $region33
  $region32: #{basic_block_forward.4} parent=0 // pred_region
    _
  $region33: #{basic_block_forward.4} parent=0 // pred_fallthru
    _
  // Predicated region
  $region34: #{basic_block_forward.4} parent=0 // pred_check
    _
  $region35: #{basic_block_forward.4} parent=0 // pred_check_branch
    %764 = sbr.rel (0) target = $region37
  $region36: #{basic_block_forward.4} parent=0 // pred_region
    _
  $region37: #{basic_block_forward.4} parent=0 // pred_fallthru
    _
  // Predicated region
  $region38: #{basic_block_forward.4} parent=0 // pred_check
    _
  $region39: #{basic_block_forward.4} parent=0 // pred_check_branch
    %766 = sbr.rel (0) target = $region41
  $region40: #{basic_block_forward.4} parent=0 // pred_region
    _
  $region41: #{basic_block_forward.4} parent=0 // pred_fallthru
    _
  // Predicated region
  $region42: #{basic_block_forward.4} parent=0 // pred_check
    _
  $region43: #{basic_block_forward.4} parent=0 // pred_check_branch
    %768 = sbr.rel (0) target = $region45
  $region44: #{basic_block_forward.4} parent=0 // pred_region
    _
  $region45: #{basic_block_forward.4} parent=0 // pred_fallthru
    _
  // Predicated region
  $region46: #{basic_block_forward.4} parent=0 // pred_check
    _
  $region47: #{basic_block_forward.4} parent=0 // pred_check_branch
    %770 = sbr.rel (0) target = $region49
  $region48: #{basic_block_forward.4} parent=0 // pred_region
    _
  $region49: #{basic_block_forward.4} parent=0 // pred_fallthru
    _
  // Predicated region
  $region50: #{basic_block_forward.4} parent=0 // pred_check
    _
  $region51: #{basic_block_forward.4} parent=0 // pred_check_branch
    %772 = sbr.rel (0) target = $region53
  $region52: #{basic_block_forward.4} parent=0 // pred_region
    _
  $region53: #{basic_block_forward.4} parent=0 // pred_fallthru
    _
  // Predicated region
  $region54: #{basic_block_forward.4} parent=0 // pred_check
    _
  $region55: #{basic_block_forward.4} parent=0 // pred_check_branch
    %774 = sbr.rel (0) target = $region57
  $region56: #{basic_block_forward.4} parent=0 // pred_region
    _
  $region57: #{basic_block_forward.4} parent=0 // pred_fallthru
    _
  // Predicated region
  $region58: #{basic_block_forward.4} parent=0 // pred_check
    _
  $region59: #{basic_block_forward.4} parent=0 // pred_check_branch
    %776 = sbr.rel (0) target = $region61
  $region60: #{basic_block_forward.4} parent=0 // pred_region
    _
  $region61: #{basic_block_forward.4} parent=0 // pred_fallthru
    _
  // Predicated region
  $region62: #{basic_block_forward.4} parent=0 // pred_check
    _
  $region63: #{basic_block_forward.4} parent=0 // pred_check_branch
    %778 = sbr.rel (0) target = $region65
  $region64: #{basic_block_forward.4} parent=0 // pred_region
    _
  $region65: #{basic_block_forward.4} parent=0 // pred_fallthru
    _

// kernel: basic_block_forward.7
$region0: #{basic_block_forward.7}
  #allocation0 [shape = 'u32[]', space=smem, size = 0x4, offset = 0x4, fixed_abs, tag = 'smem constant byte address 0x4 - core index']
  #allocation1 [shape = 'u32[144,128]{1,0:T(1,128)}', space=vmem, size = 0x12000, scoped, tag = 'internal scratch']
  %s0 = inlined_call_operand.vmem [shape: bf16[128,8], index: 0, kind: input, shape index: {}]
  %s1 = inlined_call_operand.vmem [shape: f32[1,8], index: 1, kind: input, shape index: {}]
  %s2 = inlined_call_operand.vmem [shape: f32[1,8], index: 2, kind: input, shape index: {}]
  %s3 = inlined_call_operand.vmem [shape: bf16[128,8], index: 3, kind: input, shape index: {}]
  %s4 = inlined_call_operand.vmem [shape: f32[1,8], index: 4, kind: input, shape index: {}]
  %s5 = inlined_call_operand.vmem [shape: f32[1,8], index: 5, kind: input, shape index: {}]
  %s6 = inlined_call_operand.hbm [shape: f32[128,8], index: 6, kind: output, shape index: {}]
  %s7 = sld [smem:[#allocation0]]
  $region34: #{basic_block_forward.7} parent=0
    _
  %s9 = ssub.s32 1, %s7
  %s10 = scalar_select 0, %s9, %s7
  $region1: #{basic_block_forward.7} parent=0
    #allocation2 [shape = 'u8[65536]{0}', space=vmem, size = 0x10000, scoped, tag = 'output window, operand 0, single buffered']
    #allocation3 [shape = 's32[1]{0}', space=sflag, size = 0x4, scoped, tag = 'scoped memory for basic_block_forward.7']
    %11 = vsyncpa [#allocation3], 0
    // Predicated region
    $region2: #{basic_block_forward.7} parent=1 // pred_check
      _
    $region3: #{basic_block_forward.7} parent=1 // pred_check_branch
      %13 = sbr.rel (0) target = $region5
    $region4: #{basic_block_forward.7} parent=1 // pred_region
      _
    $region5: #{basic_block_forward.7} parent=1 // pred_fallthru
      _
    // Predicated region
    $region6: #{basic_block_forward.7} parent=1 // pred_check
      _
    $region7: #{basic_block_forward.7} parent=1 // pred_check_branch
      %15 = sbr.rel (0) target = $region9
    $region8: #{basic_block_forward.7} parent=1 // pred_region
      _
    $region9: #{basic_block_forward.7} parent=1 // pred_fallthru
      _
    // Predicated region
    $region10: #{basic_block_forward.7} parent=1 // pred_check
      _
    $region11: #{basic_block_forward.7} parent=1 // pred_check_branch
      %17 = sbr.rel (0) target = $region13
    $region12: #{basic_block_forward.7} parent=1 // pred_region
      _
    $region13: #{basic_block_forward.7} parent=1 // pred_fallthru
      _
    // Predicated region
    $region14: #{basic_block_forward.7} parent=1 // pred_check
      _
    $region15: #{basic_block_forward.7} parent=1 // pred_check_branch
      %19 = sbr.rel (0) target = $region17
    $region16: #{basic_block_forward.7} parent=1 // pred_region
      _
    $region17: #{basic_block_forward.7} parent=1 // pred_fallthru
      _
    // Predicated region
    $region18: #{basic_block_forward.7} parent=1 // pred_check
      _
    $region19: #{basic_block_forward.7} parent=1 // pred_check_branch
      %21 = sbr.rel (0) target = $region21
    $region20: #{basic_block_forward.7} parent=1 // pred_region
      _
    $region21: #{basic_block_forward.7} parent=1 // pred_fallthru
      _
    // Predicated region
    $region22: #{basic_block_forward.7} parent=1 // pred_check
      _
    $region23: #{basic_block_forward.7} parent=1 // pred_check_branch
      %23 = sbr.rel (0) target = $region25
    $region24: #{basic_block_forward.7} parent=1 // pred_region
      _
    $region25: #{basic_block_forward.7} parent=1 // pred_fallthru
      _
    %v24 = vld [vmem:[%s0] sm:$0xf]
    %v25 = vld [vmem:[%s0 + $0x4] sm:$0xf]
    %v26 = vld [vmem:[%s0 + $0x8] sm:$0xf]
    %v27 = vld [vmem:[%s0 + $0xc] sm:$0xf]
    %v28 = vld [vmem:[%s0 + $0x10] sm:$0xf]
    %v29 = vld [vmem:[%s0 + $0x14] sm:$0xf]
    %v30 = vld [vmem:[%s0 + $0x18] sm:$0xf]
    %v31 = vld [vmem:[%s0 + $0x1c] sm:$0xf]
    %v32 = vld [vmem:[%s0 + $0x20] sm:$0xf]
    %v33 = vld [vmem:[%s0 + $0x24] sm:$0xf]
    %v34 = vld [vmem:[%s0 + $0x28] sm:$0xf]
    %v35 = vld [vmem:[%s0 + $0x2c] sm:$0xf]
    %v36 = vld [vmem:[%s0 + $0x30] sm:$0xf]
    %v37 = vld [vmem:[%s0 + $0x34] sm:$0xf]
    %v38 = vld [vmem:[%s0 + $0x38] sm:$0xf]
    %v39 = vld [vmem:[%s0 + $0x3c] sm:$0xf]
    %v40 = vunpack.c.l.bf16 %v24
    %v41 = vunpack.c.l.bf16 %v25
    %v42 = vunpack.c.l.bf16 %v26
    %v43 = vunpack.c.l.bf16 %v27
    %v44 = vunpack.c.l.bf16 %v28
    %v45 = vunpack.c.l.bf16 %v29
    %v46 = vunpack.c.l.bf16 %v30
    %v47 = vunpack.c.l.bf16 %v31
    %v48 = vunpack.c.l.bf16 %v32
    %v49 = vunpack.c.l.bf16 %v33
    %v50 = vunpack.c.l.bf16 %v34
    %v51 = vunpack.c.l.bf16 %v35
    %v52 = vunpack.c.l.bf16 %v36
    %v53 = vunpack.c.l.bf16 %v37
    %v54 = vunpack.c.l.bf16 %v38
    %v55 = vunpack.c.l.bf16 %v39
    %v56 = vld [vmem:[%s1] sm:$0x1]
    %v58 = vlaneseq
    %v59 = vshrl.u32 %v58, 7
    %v60 = vsub.s32 0, %v59
    %v61 = vrot.slane %v56, %v60
    %v63 = vmul.f32 %v40, %v61
    %v64 = vmul.f32 %v41, %v61
    %v65 = vmul.f32 %v42, %v61
    %v66 = vmul.f32 %v43, %v61
    %v67 = vmul.f32 %v44, %v61
    %v68 = vmul.f32 %v45, %v61
    %v69 = vmul.f32 %v46, %v61
    %v70 = vmul.f32 %v47, %v61
    %v71 = vmul.f32 %v48, %v61
    %v72 = vmul.f32 %v49, %v61
    %v73 = vmul.f32 %v50, %v61
    %v74 = vmul.f32 %v51, %v61
    %v75 = vmul.f32 %v52, %v61
    %v76 = vmul.f32 %v53, %v61
    %v77 = vmul.f32 %v54, %v61
    %v78 = vmul.f32 %v55, %v61
    %v79 = vld [vmem:[%s2] sm:$0x1]
    %v81 = vlaneseq
    %v82 = vshrl.u32 %v81, 7
    %v83 = vsub.s32 0, %v82
    %v84 = vrot.slane %v79, %v83
    %v86 = vadd.f32 %v63, %v84
    %v87 = vadd.f32 %v64, %v84
    %v88 = vadd.f32 %v65, %v84
    %v89 = vadd.f32 %v66, %v84
    %v90 = vadd.f32 %v67, %v84
    %v91 = vadd.f32 %v68, %v84
    %v92 = vadd.f32 %v69, %v84
    %v93 = vadd.f32 %v70, %v84
    %v94 = vadd.f32 %v71, %v84
    %v95 = vadd.f32 %v72, %v84
    %v96 = vadd.f32 %v73, %v84
    %v97 = vadd.f32 %v74, %v84
    %v98 = vadd.f32 %v75, %v84
    %v99 = vadd.f32 %v76, %v84
    %v100 = vadd.f32 %v77, %v84
    %v101 = vadd.f32 %v78, %v84
    %v102 = vmax.f32 %v86, 0.0
    %v103 = vmax.f32 %v87, 0.0
    %v104 = vmax.f32 %v88, 0.0
    %v105 = vmax.f32 %v89, 0.0
    %v106 = vmax.f32 %v90, 0.0
    %v107 = vmax.f32 %v91, 0.0
    %v108 = vmax.f32 %v92, 0.0
    %v109 = vmax.f32 %v93, 0.0
    %v110 = vmax.f32 %v94, 0.0
    %v111 = vmax.f32 %v95, 0.0
    %v112 = vmax.f32 %v96, 0.0
    %v113 = vmax.f32 %v97, 0.0
    %v114 = vmax.f32 %v98, 0.0
    %v115 = vmax.f32 %v99, 0.0
    %v116 = vmax.f32 %v100, 0.0
    %v117 = vmax.f32 %v101, 0.0
    %v118 = vld [vmem:[%s3] sm:$0xf]
    %v119 = vld [vmem:[%s3 + $0x4] sm:$0xf]
    %v120 = vld [vmem:[%s3 + $0x8] sm:$0xf]
    %v121 = vld [vmem:[%s3 + $0xc] sm:$0xf]
    %v122 = vld [vmem:[%s3 + $0x10] sm:$0xf]
    %v123 = vld [vmem:[%s3 + $0x14] sm:$0xf]
    %v124 = vld [vmem:[%s3 + $0x18] sm:$0xf]
    %v125 = vld [vmem:[%s3 + $0x1c] sm:$0xf]
    %v126 = vld [vmem:[%s3 + $0x20] sm:$0xf]
    %v127 = vld [vmem:[%s3 + $0x24] sm:$0xf]
    %v128 = vld [vmem:[%s3 + $0x28] sm:$0xf]
    %v129 = vld [vmem:[%s3 + $0x2c] sm:$0xf]
    %v130 = vld [vmem:[%s3 + $0x30] sm:$0xf]
    %v131 = vld [vmem:[%s3 + $0x34] sm:$0xf]
    %v132 = vld [vmem:[%s3 + $0x38] sm:$0xf]
    %v133 = vld [vmem:[%s3 + $0x3c] sm:$0xf]
    %v134 = vunpack.c.l.bf16 %v118
    %v135 = vunpack.c.l.bf16 %v119
    %v136 = vunpack.c.l.bf16 %v120
    %v137 = vunpack.c.l.bf16 %v121
    %v138 = vunpack.c.l.bf16 %v122
    %v139 = vunpack.c.l.bf16 %v123
    %v140 = vunpack.c.l.bf16 %v124
    %v141 = vunpack.c.l.bf16 %v125
    %v142 = vunpack.c.l.bf16 %v126
    %v143 = vunpack.c.l.bf16 %v127
    %v144 = vunpack.c.l.bf16 %v128
    %v145 = vunpack.c.l.bf16 %v129
    %v146 = vunpack.c.l.bf16 %v130
    %v147 = vunpack.c.l.bf16 %v131
    %v148 = vunpack.c.l.bf16 %v132
    %v149 = vunpack.c.l.bf16 %v133
    %v150 = vld [vmem:[%s4] sm:$0x1]
    %v152 = vlaneseq
    %v153 = vshrl.u32 %v152, 7
    %v154 = vsub.s32 0, %v153
    %v155 = vrot.slane %v150, %v154
    %v157 = vmul.f32 %v134, %v155
    %v158 = vmul.f32 %v135, %v155
    %v159 = vmul.f32 %v136, %v155
    %v160 = vmul.f32 %v137, %v155
    %v161 = vmul.f32 %v138, %v155
    %v162 = vmul.f32 %v139, %v155
    %v163 = vmul.f32 %v140, %v155
    %v164 = vmul.f32 %v141, %v155
    %v165 = vmul.f32 %v142, %v155
    %v166 = vmul.f32 %v143, %v155
    %v167 = vmul.f32 %v144, %v155
    %v168 = vmul.f32 %v145, %v155
    %v169 = vmul.f32 %v146, %v155
    %v170 = vmul.f32 %v147, %v155
    %v171 = vmul.f32 %v148, %v155
    %v172 = vmul.f32 %v149, %v155
    %v173 = vld [vmem:[%s5] sm:$0x1]
    %v175 = vlaneseq
    %v176 = vshrl.u32 %v175, 7
    %v177 = vsub.s32 0, %v176
    %v178 = vrot.slane %v173, %v177
    %v180 = vadd.f32 %v157, %v178
    %v181 = vadd.f32 %v158, %v178
    %v182 = vadd.f32 %v159, %v178
    %v183 = vadd.f32 %v160, %v178
    %v184 = vadd.f32 %v161, %v178
    %v185 = vadd.f32 %v162, %v178
    %v186 = vadd.f32 %v163, %v178
    %v187 = vadd.f32 %v164, %v178
    %v188 = vadd.f32 %v165, %v178
    %v189 = vadd.f32 %v166, %v178
    %v190 = vadd.f32 %v167, %v178
    %v191 = vadd.f32 %v168, %v178
    %v192 = vadd.f32 %v169, %v178
    %v193 = vadd.f32 %v170, %v178
    %v194 = vadd.f32 %v171, %v178
    %v195 = vadd.f32 %v172, %v178
    %v196 = vadd.f32 %v102, %v180
    %v197 = vadd.f32 %v103, %v181
    %v198 = vadd.f32 %v104, %v182
    %v199 = vadd.f32 %v105, %v183
    %v200 = vadd.f32 %v106, %v184
    %v201 = vadd.f32 %v107, %v185
    %v202 = vadd.f32 %v108, %v186
    %v203 = vadd.f32 %v109, %v187
    %v204 = vadd.f32 %v110, %v188
    %v205 = vadd.f32 %v111, %v189
    %v206 = vadd.f32 %v112, %v190
    %v207 = vadd.f32 %v113, %v191
    %v208 = vadd.f32 %v114, %v192
    %v209 = vadd.f32 %v115, %v193
    %v210 = vadd.f32 %v116, %v194
    %v211 = vadd.f32 %v117, %v195
    %v212 = vmax.f32 %v196, 0.0
    %v213 = vmax.f32 %v197, 0.0
    %v214 = vmax.f32 %v198, 0.0
    %v215 = vmax.f32 %v199, 0.0
    %v216 = vmax.f32 %v200, 0.0
    %v217 = vmax.f32 %v201, 0.0
    %v218 = vmax.f32 %v202, 0.0
    %v219 = vmax.f32 %v203, 0.0
    %v220 = vmax.f32 %v204, 0.0
    %v221 = vmax.f32 %v205, 0.0
    %v222 = vmax.f32 %v206, 0.0
    %v223 = vmax.f32 %v207, 0.0
    %v224 = vmax.f32 %v208, 0.0
    %v225 = vmax.f32 %v209, 0.0
    %v226 = vmax.f32 %v210, 0.0
    %v227 = vmax.f32 %v211, 0.0
    %vm228 = vcmask 64512
    %229 = vst.msk [vmem:[#allocation2] sm:$0xff] %vm228, %v212
    %230 = vst.msk [vmem:[#allocation2 + $0x8] sm:$0xff] %vm228, %v213
    %231 = vst.msk [vmem:[#allocation2 + $0x10] sm:$0xff] %vm228, %v214
    %232 = vst.msk [vmem:[#allocation2 + $0x18] sm:$0xff] %vm228, %v215
    %233 = vst.msk [vmem:[#allocation2 + $0x20] sm:$0xff] %vm228, %v216
    %234 = vst.msk [vmem:[#allocation2 + $0x28] sm:$0xff] %vm228, %v217
    %235 = vst.msk [vmem:[#allocation2 + $0x30] sm:$0xff] %vm228, %v218
    %236 = vst.msk [vmem:[#allocation2 + $0x38] sm:$0xff] %vm228, %v219
    %237 = vst.msk [vmem:[#allocation2 + $0x40] sm:$0xff] %vm228, %v220
    %238 = vst.msk [vmem:[#allocation2 + $0x48] sm:$0xff] %vm228, %v221
    %239 = vst.msk [vmem:[#allocation2 + $0x50] sm:$0xff] %vm228, %v222
    %240 = vst.msk [vmem:[#allocation2 + $0x58] sm:$0xff] %vm228, %v223
    %241 = vst.msk [vmem:[#allocation2 + $0x60] sm:$0xff] %vm228, %v224
    %242 = vst.msk [vmem:[#allocation2 + $0x68] sm:$0xff] %vm228, %v225
    %243 = vst.msk [vmem:[#allocation2 + $0x70] sm:$0xff] %vm228, %v226
    %244 = vst.msk [vmem:[#allocation2 + $0x78] sm:$0xff] %vm228, %v227
    // Predicated region
    $region26: #{basic_block_forward.7} parent=1 // pred_check
      _
    $region27: #{basic_block_forward.7} parent=1 // pred_check_branch
      %246 = sbr.rel (0) target = $region29
    $region28: #{basic_block_forward.7} parent=1 // pred_region
      %s248 = ssub.s32 2048, 2048
      %249 = vsyncadd [#allocation3], %s248
      %s250 = sshll.u32 [#allocation2], 4
      %s251 = int_to_ptr.vmem [resolvable:$true] %s250
      %256 = dma.vmem_to_hbm [thread:$0]  %s251, 2048, %s6, [#allocation3], 128, 128, 8
    $region29: #{basic_block_forward.7} parent=1 // pred_fallthru
      _
    // Predicated region
    $region30: #{basic_block_forward.7} parent=1 // pred_check
      _
    $region31: #{basic_block_forward.7} parent=1 // pred_check_branch
      %258 = sbr.rel (0) target = $region33
    $region32: #{basic_block_forward.7} parent=1 // pred_region
      %259 = dma.done [#allocation3], 2048
    $region33: #{basic_block_forward.7} parent=1 // pred_fallthru
      _
    %260 = vsyncpa [#allocation3], 1

// kernel: basic_block_forward.6
$region0: #{basic_block_forward.6}
  #allocation0 [shape = 'u32[]', space=smem, size = 0x4, offset = 0x4, fixed_abs, tag = 'smem constant byte address 0x4 - core index']
  #allocation1 [shape = 'u32[144,128]{1,0:T(1,128)}', space=vmem, size = 0x12000, scoped, tag = 'internal scratch']
  %s0 = inlined_call_operand.vmem [shape: bf16[128,72], index: 0, kind: input, shape index: {}]
  %s1 = inlined_call_operand.vmem [shape: bf16[72,8], index: 1, kind: input, shape index: {}]
  %s2 = inlined_call_operand.vmem [shape: bf16[128,8], index: 2, kind: output, shape index: {0}]
  %s3 = inlined_call_operand.vmem [shape: f32[1,1,8], index: 3, kind: output, shape index: {1}]
  %s4 = inlined_call_operand.vmem [shape: f32[1,1,8], index: 4, kind: output, shape index: {2}]
  %5 = xla_tuple %s2, %s3, %s4
  %s6 = sld [smem:[#allocation0]]
  $region34: #{basic_block_forward.6} parent=0
    _
  %s8 = ssub.s32 1, %s6
  %s9 = scalar_select 0, %s8, %s6
  // Predicated region
  $region2: #{basic_block_forward.6} parent=0 // pred_check
    _
  $region3: #{basic_block_forward.6} parent=0 // pred_check_branch
    %11 = sbr.rel (0) target = $region5
  $region4: #{basic_block_forward.6} parent=0 // pred_region
    _
  $region5: #{basic_block_forward.6} parent=0 // pred_fallthru
    _
  // Predicated region
  $region6: #{basic_block_forward.6} parent=0 // pred_check
    _
  $region7: #{basic_block_forward.6} parent=0 // pred_check_branch
    %13 = sbr.rel (0) target = $region9
  $region8: #{basic_block_forward.6} parent=0 // pred_region
    _
  $region9: #{basic_block_forward.6} parent=0 // pred_fallthru
    _
  %v15 = vld [vmem:[%s0] sm:$0xf]
  %v16 = vld [vmem:[%s0 + $0x4] sm:$0xf]
  %v17 = vld [vmem:[%s0 + $0x8] sm:$0xf]
  %v18 = vld [vmem:[%s0 + $0xc] sm:$0xf]
  %v19 = vld [vmem:[%s0 + $0x10] sm:$0xf]
  %v20 = vld [vmem:[%s0 + $0x14] sm:$0xf]
  %v21 = vld [vmem:[%s0 + $0x18] sm:$0xf]
  %v22 = vld [vmem:[%s0 + $0x1c] sm:$0xf]
  %v23 = vld [vmem:[%s0 + $0x20] sm:$0xf]
  %v24 = vld [vmem:[%s0 + $0x24] sm:$0xf]
  %v25 = vld [vmem:[%s0 + $0x28] sm:$0xf]
  %v26 = vld [vmem:[%s0 + $0x2c] sm:$0xf]
  %v27 = vld [vmem:[%s0 + $0x30] sm:$0xf]
  %v28 = vld [vmem:[%s0 + $0x34] sm:$0xf]
  %v29 = vld [vmem:[%s0 + $0x38] sm:$0xf]
  %v30 = vld [vmem:[%s0 + $0x3c] sm:$0xf]
  %v31 = vld [vmem:[%s1] sm:$0xf]
  %v32 = vld [vmem:[%s1 + $0x4] sm:$0xf]
  %v33 = vld [vmem:[%s1 + $0x8] sm:$0xf]
  %v34 = vld [vmem:[%s1 + $0xc] sm:$0xf]
  %v35 = vld [vmem:[%s1 + $0x10] sm:$0xf]
  %v36 = vld [vmem:[%s1 + $0x14] sm:$0xf]
  %v37 = vld [vmem:[%s1 + $0x18] sm:$0xf]
  %v38 = vld [vmem:[%s1 + $0x1c] sm:$0xf]
  %v39 = vld [vmem:[%s1 + $0x20] sm:$0xf]
  %v56 = vunpack.c.l.b16 %v15
  %v57 = vunpack.c.l.b16 %v16
  %v58 = vunpack.c.l.b16 %v17
  %v59 = vunpack.c.l.b16 %v18
  %v60 = vunpack.c.l.b16 %v19
  %v61 = vunpack.c.l.b16 %v20
  %v62 = vunpack.c.l.b16 %v21
  %v63 = vunpack.c.l.b16 %v22
  %v64 = vunpack.c.l.b16 %v23
  %v65 = vunpack.c.l.b16 %v24
  %v66 = vunpack.c.l.b16 %v25
  %v67 = vunpack.c.l.b16 %v26
  %v68 = vunpack.c.l.b16 %v27
  %v69 = vunpack.c.l.b16 %v28
  %v70 = vunpack.c.l.b16 %v29
  %v71 = vunpack.c.l.b16 %v30
  %v72 = vpack.c.b16 %v57, %v56
  %v73 = vpack.c.b16 %v59, %v58
  %v74 = vpack.c.b16 %v61, %v60
  %v75 = vpack.c.b16 %v63, %v62
  %v76 = vpack.c.b16 %v65, %v64
  %v77 = vpack.c.b16 %v67, %v66
  %v78 = vpack.c.b16 %v69, %v68
  %v79 = vpack.c.b16 %v71, %v70
  %v89 = vunpack.c.l.b16 %v31
  %v90 = vunpack.c.l.b16 %v32
  %v91 = vunpack.c.l.b16 %v33
  %v92 = vunpack.c.l.b16 %v34
  %v93 = vunpack.c.l.b16 %v35
  %v94 = vunpack.c.l.b16 %v36
  %v95 = vunpack.c.l.b16 %v37
  %v96 = vunpack.c.l.b16 %v38
  %v97 = vunpack.c.l.b16 %v39
  %v98 = vpack.c.b16 %v90, %v89
  %v99 = vpack.c.b16 %v92, %v91
  %v100 = vpack.c.b16 %v94, %v93
  %v101 = vpack.c.b16 %v96, %v95
  %v102 = vpack.c.b16 %v97, %v97
  %vm107 = vcmask 588800
  %v109 = vsel %vm107, %v72, 0
  %v112 = vsel %vm107, %v73, 0
  %v115 = vsel %vm107, %v74, 0
  %v118 = vsel %vm107, %v75, 0
  %v121 = vsel %vm107, %v76, 0
  %v124 = vsel %vm107, %v77, 0
  %v127 = vsel %vm107, %v78, 0
  %v130 = vsel %vm107, %v79, 0
  %vm132 = vcmask 1043456
  %v134 = vsel %vm132, %v102, 0
  %136 = vmatprep.subr.bf16.mxu0 0
  %137 = vmatpush1.bf16.msra.mxu0 0
  %138 = vmatprep.subr.bf16.mxu0 0
  %139 = vmatpush1.bf16.msra.mxu0 0
  %140 = vmatprep.subr.bf16.mxu0 0
  %141 = vmatpush1.bf16.msra.mxu0 0
  %142 = vmatprep.subr.bf16.mxu0 0
  %143 = vmatpush1.bf16.msra.mxu0 %v134
  %144 = vmatprep.subr.bf16.mxu0 0
  %145 = vmatpush1.bf16.msra.mxu0 %v101
  %146 = vmatprep.subr.bf16.mxu0 0
  %147 = vmatpush1.bf16.msra.mxu0 %v100
  %148 = vmatprep.subr.bf16.mxu0 0
  %149 = vmatpush1.bf16.msra.mxu0 %v99
  %150 = vmatprep.subr.bf16.mxu0 0
  %151 = vmatpush1.bf16.msra.mxu0 %v98
  %152 = vmatprep.subr.bf16.mxu0 0
  %153 = vmatpush2.bf16.msra.mxu0 0
  %154 = vmatprep.subr.bf16.mxu0 0
  %155 = vmatpush2.bf16.msra.mxu0 0
  %156 = vmatprep.subr.bf16.mxu0 0
  %157 = vmatpush2.bf16.msra.mxu0 0
  %158 = vmatprep.subr.bf16.mxu0 0
  %159 = vmatpush2.bf16.msra.mxu0 0
  %160 = vmatprep.subr.bf16.mxu0 0
  %161 = vmatpush2.bf16.msra.mxu0 0
  %162 = vmatprep.subr.bf16.mxu0 0
  %163 = vmatpush2.bf16.msra.mxu0 0
  %164 = vmatprep.subr.bf16.mxu0 0
  %165 = vmatpush2.bf16.msra.mxu0 0
  %166 = vmatprep.subr.bf16.mxu0 0
  %167 = vmatpush2.bf16.msra.mxu0 0
  %168 = vmatprep.mubr.bf16.mxu0 0
  %169 = vmatmul.mubr.bf16.gmra.mxu0 %v109
  %v170 = vpop.f32.mrf.mxu0
  %v171 = vadd.f32 0.0, %v170
  %v172 = vpop.f32.mrf.mxu0
  %v173 = vpop.f32.mrf.mxu0
  %v174 = vadd.f32 0.0, %v173
  %v175 = vpop.f32.mrf.mxu0
  %176 = vmatprep.mubr.bf16.mxu0 0
  %177 = vmatmul.mubr.bf16.gmra.mxu0 %v112
  %v178 = vpop.f32.mrf.mxu0
  %v179 = vadd.f32 0.0, %v178
  %v180 = vpop.f32.mrf.mxu0
  %v181 = vpop.f32.mrf.mxu0
  %v182 = vadd.f32 0.0, %v181
  %v183 = vpop.f32.mrf.mxu0
  %184 = vmatprep.mubr.bf16.mxu0 0
  %185 = vmatmul.mubr.bf16.gmra.mxu0 %v115
  %v186 = vpop.f32.mrf.mxu0
  %v187 = vadd.f32 0.0, %v186
  %v188 = vpop.f32.mrf.mxu0
  %v189 = vpop.f32.mrf.mxu0
  %v190 = vadd.f32 0.0, %v189
  %v191 = vpop.f32.mrf.mxu0
  %192 = vmatprep.mubr.bf16.mxu0 0
  %193 = vmatmul.mubr.bf16.gmra.mxu0 %v118
  %v194 = vpop.f32.mrf.mxu0
  %v195 = vadd.f32 0.0, %v194
  %v196 = vpop.f32.mrf.mxu0
  %v197 = vpop.f32.mrf.mxu0
  %v198 = vadd.f32 0.0, %v197
  %v199 = vpop.f32.mrf.mxu0
  %200 = vmatprep.mubr.bf16.mxu0 0
  %201 = vmatmul.mubr.bf16.gmra.mxu0 %v121
  %v202 = vpop.f32.mrf.mxu0
  %v203 = vadd.f32 0.0, %v202
  %v204 = vpop.f32.mrf.mxu0
  %v205 = vpop.f32.mrf.mxu0
  %v206 = vadd.f32 0.0, %v205
  %v207 = vpop.f32.mrf.mxu0
  %208 = vmatprep.mubr.bf16.mxu0 0
  %209 = vmatmul.mubr.bf16.gmra.mxu0 %v124
  %v210 = vpop.f32.mrf.mxu0
  %v211 = vadd.f32 0.0, %v210
  %v212 = vpop.f32.mrf.mxu0
  %v213 = vpop.f32.mrf.mxu0
  %v214 = vadd.f32 0.0, %v213
  %v215 = vpop.f32.mrf.mxu0
  %216 = vmatprep.mubr.bf16.mxu0 0
  %217 = vmatmul.mubr.bf16.gmra.mxu0 %v127
  %v218 = vpop.f32.mrf.mxu0
  %v219 = vadd.f32 0.0, %v218
  %v220 = vpop.f32.mrf.mxu0
  %v221 = vpop.f32.mrf.mxu0
  %v222 = vadd.f32 0.0, %v221
  %v223 = vpop.f32.mrf.mxu0
  %224 = vmatprep.mubr.bf16.mxu0 0
  %225 = vmatmul.mubr.bf16.gmra.mxu0 %v130
  %v226 = vpop.f32.mrf.mxu0
  %v227 = vadd.f32 0.0, %v226
  %v228 = vpop.f32.mrf.mxu0
  %v229 = vpop.f32.mrf.mxu0
  %v230 = vadd.f32 0.0, %v229
  %v231 = vpop.f32.mrf.mxu0
  %232 = vdwg.mxu0
  %v233 = vpack.c.bf16 %v174, %v171
  %v234 = vpack.c.bf16 %v182, %v179
  %v235 = vpack.c.bf16 %v190, %v187
  %v236 = vpack.c.bf16 %v198, %v195
  %v237 = vpack.c.bf16 %v206, %v203
  %v238 = vpack.c.bf16 %v214, %v211
  %v239 = vpack.c.bf16 %v222, %v219
  %v240 = vpack.c.bf16 %v230, %v227
  %v249 = vunpack.c.l.b16 %v233
  %v250 = vunpack.c.h.b16 %v233
  %v251 = vunpack.c.l.b16 %v234
  %v252 = vunpack.c.h.b16 %v234
  %v253 = vunpack.c.l.b16 %v235
  %v254 = vunpack.c.h.b16 %v235
  %v255 = vunpack.c.l.b16 %v236
  %v256 = vunpack.c.h.b16 %v236
  %v257 = vunpack.c.l.b16 %v237
  %v258 = vunpack.c.h.b16 %v237
  %v259 = vunpack.c.l.b16 %v238
  %v260 = vunpack.c.h.b16 %v238
  %v261 = vunpack.c.l.b16 %v239
  %v262 = vunpack.c.h.b16 %v239
  %v263 = vunpack.c.l.b16 %v240
  %v264 = vunpack.c.h.b16 %v240
  %v265 = vpack.c.b16 %v249, %v249
  %v266 = vpack.c.b16 %v250, %v250
  %v267 = vpack.c.b16 %v251, %v251
  %v268 = vpack.c.b16 %v252, %v252
  %v269 = vpack.c.b16 %v253, %v253
  %v270 = vpack.c.b16 %v254, %v254
  %v271 = vpack.c.b16 %v255, %v255
  %v272 = vpack.c.b16 %v256, %v256
  %v273 = vpack.c.b16 %v257, %v257
  %v274 = vpack.c.b16 %v258, %v258
  %v275 = vpack.c.b16 %v259, %v259
  %v276 = vpack.c.b16 %v260, %v260
  %v277 = vpack.c.b16 %v261, %v261
  %v278 = vpack.c.b16 %v262, %v262
  %v279 = vpack.c.b16 %v263, %v263
  %v280 = vpack.c.b16 %v264, %v264
  %vm297 = vcmask 60416
  %298 = vst.msk [vmem:[%s2] sm:$0xf] %vm297, %v265
  %299 = vst.msk [vmem:[%s2 + $0x4] sm:$0xf] %vm297, %v266
  %300 = vst.msk [vmem:[%s2 + $0x8] sm:$0xf] %vm297, %v267
  %301 = vst.msk [vmem:[%s2 + $0xc] sm:$0xf] %vm297, %v268
  %302 = vst.msk [vmem:[%s2 + $0x10] sm:$0xf] %vm297, %v269
  %303 = vst.msk [vmem:[%s2 + $0x14] sm:$0xf] %vm297, %v270
  %304 = vst.msk [vmem:[%s2 + $0x18] sm:$0xf] %vm297, %v271
  %305 = vst.msk [vmem:[%s2 + $0x1c] sm:$0xf] %vm297, %v272
  %306 = vst.msk [vmem:[%s2 + $0x20] sm:$0xf] %vm297, %v273
  %307 = vst.msk [vmem:[%s2 + $0x24] sm:$0xf] %vm297, %v274
  %308 = vst.msk [vmem:[%s2 + $0x28] sm:$0xf] %vm297, %v275
  %309 = vst.msk [vmem:[%s2 + $0x2c] sm:$0xf] %vm297, %v276
  %310 = vst.msk [vmem:[%s2 + $0x30] sm:$0xf] %vm297, %v277
  %311 = vst.msk [vmem:[%s2 + $0x34] sm:$0xf] %vm297, %v278
  %312 = vst.msk [vmem:[%s2 + $0x38] sm:$0xf] %vm297, %v279
  %313 = vst.msk [vmem:[%s2 + $0x3c] sm:$0xf] %vm297, %v280
  %vm314 = vcmask 64512
  %v315 = vsel %vm314, %v171, 0.0
  %v316 = vsel %vm314, %v174, 0.0
  %v317 = vadd.f32 %v315, %v316
  %v318 = vsel %vm314, %v179, 0.0
  %v319 = vadd.f32 %v317, %v318
  %v320 = vsel %vm314, %v182, 0.0
  %v321 = vadd.f32 %v319, %v320
  %v322 = vsel %vm314, %v187, 0.0
  %v323 = vadd.f32 %v321, %v322
  %v324 = vsel %vm314, %v190, 0.0
  %v325 = vadd.f32 %v323, %v324
  %v326 = vsel %vm314, %v195, 0.0
  %v327 = vadd.f32 %v325, %v326
  %v328 = vsel %vm314, %v198, 0.0
  %v329 = vadd.f32 %v327, %v328
  %v330 = vsel %vm314, %v203, 0.0
  %v331 = vadd.f32 %v329, %v330
  %v332 = vsel %vm314, %v206, 0.0
  %v333 = vadd.f32 %v331, %v332
  %v334 = vsel %vm314, %v211, 0.0
  %v335 = vadd.f32 %v333, %v334
  %v336 = vsel %vm314, %v214, 0.0
  %v337 = vadd.f32 %v335, %v336
  %v338 = vsel %vm314, %v219, 0.0
  %v339 = vadd.f32 %v337, %v338
  %v340 = vsel %vm314, %v222, 0.0
  %v341 = vadd.f32 %v339, %v340
  %v342 = vsel %vm314, %v227, 0.0
  %v343 = vadd.f32 %v341, %v342
  %v344 = vsel %vm314, %v230, 0.0
  %v345 = vadd.f32 %v343, %v344
  %v346 = vrot.slane %v345, 4
  %v347 = vadd.f32 %v345, %v346
  %v348 = vrot.slane %v347, 2
  %v349 = vadd.f32 %v347, %v348
  %v350 = vrot.slane %v349, 1
  %v351 = vadd.f32 %v349, %v350
  %vm352 = vcmask 57344
  %353 = vst.msk [vmem:[%s3] sm:$0x1] %vm352, %v351
  %v354 = vmul.f32 %v171, %v171
  %v355 = vmul.f32 %v174, %v174
  %v356 = vmul.f32 %v179, %v179
  %v357 = vmul.f32 %v182, %v182
  %v358 = vmul.f32 %v187, %v187
  %v359 = vmul.f32 %v190, %v190
  %v360 = vmul.f32 %v195, %v195
  %v361 = vmul.f32 %v198, %v198
  %v362 = vmul.f32 %v203, %v203
  %v363 = vmul.f32 %v206, %v206
  %v364 = vmul.f32 %v211, %v211
  %v365 = vmul.f32 %v214, %v214
  %v366 = vmul.f32 %v219, %v219
  %v367 = vmul.f32 %v222, %v222
  %v368 = vmul.f32 %v227, %v227
  %v369 = vmul.f32 %v230, %v230
  %v370 = vsel %vm314, %v354, 0.0
  %v371 = vsel %vm314, %v355, 0.0
  %v372 = vadd.f32 %v370, %v371
  %v373 = vsel %vm314, %v356, 0.0
  %v374 = vadd.f32 %v372, %v373
  %v375 = vsel %vm314, %v357, 0.0
  %v376 = vadd.f32 %v374, %v375
  %v377 = vsel %vm314, %v358, 0.0
  %v378 = vadd.f32 %v376, %v377
  %v379 = vsel %vm314, %v359, 0.0
  %v380 = vadd.f32 %v378, %v379
  %v381 = vsel %vm314, %v360, 0.0
  %v382 = vadd.f32 %v380, %v381
  %v383 = vsel %vm314, %v361, 0.0
  %v384 = vadd.f32 %v382, %v383
  %v385 = vsel %vm314, %v362, 0.0
  %v386 = vadd.f32 %v384, %v385
  %v387 = vsel %vm314, %v363, 0.0
  %v388 = vadd.f32 %v386, %v387
  %v389 = vsel %vm314, %v364, 0.0
  %v390 = vadd.f32 %v388, %v389
  %v391 = vsel %vm314, %v365, 0.0
  %v392 = vadd.f32 %v390, %v391
  %v393 = vsel %vm314, %v366, 0.0
  %v394 = vadd.f32 %v392, %v393
  %v395 = vsel %vm314, %v367, 0.0
  %v396 = vadd.f32 %v394, %v395
  %v397 = vsel %vm314, %v368, 0.0
  %v398 = vadd.f32 %v396, %v397
  %v399 = vsel %vm314, %v369, 0.0
  %v400 = vadd.f32 %v398, %v399
  %v401 = vrot.slane %v400, 4
  %v402 = vadd.f32 %v400, %v401
  %v403 = vrot.slane %v402, 2
  %v404 = vadd.f32 %v402, %v403
  %v405 = vrot.slane %v404, 1
  %v406 = vadd.f32 %v404, %v405
  %407 = vst.msk [vmem:[%s4] sm:$0x1] %vm352, %v406
  // Predicated region
  $region10: #{basic_block_forward.6} parent=0 // pred_check
    _
  $region11: #{basic_block_forward.6} parent=0 // pred_check_branch
    %409 = sbr.rel (0) target = $region13
  $region12: #{basic_block_forward.6} parent=0 // pred_region
    _
  $region13: #{basic_block_forward.6} parent=0 // pred_fallthru
    _
  // Predicated region
  $region14: #{basic_block_forward.6} parent=0 // pred_check
    _
  $region15: #{basic_block_forward.6} parent=0 // pred_check_branch
    %411 = sbr.rel (0) target = $region17
  $region16: #{basic_block_forward.6} parent=0 // pred_region
    _
  $region17: #{basic_block_forward.6} parent=0 // pred_fallthru
    _
  // Predicated region
  $region18: #{basic_block_forward.6} parent=0 // pred_check
    _
  $region19: #{basic_block_forward.6} parent=0 // pred_check_branch
    %413 = sbr.rel (0) target = $region21
  $region20: #{basic_block_forward.6} parent=0 // pred_region
    _
  $region21: #{basic_block_forward.6} parent=0 // pred_fallthru
    _
  // Predicated region
  $region22: #{basic_block_forward.6} parent=0 // pred_check
    _
  $region23: #{basic_block_forward.6} parent=0 // pred_check_branch
    %415 = sbr.rel (0) target = $region25
  $region24: #{basic_block_forward.6} parent=0 // pred_region
    _
  $region25: #{basic_block_forward.6} parent=0 // pred_fallthru
    _
  // Predicated region
  $region26: #{basic_block_forward.6} parent=0 // pred_check
    _
  $region27: #{basic_block_forward.6} parent=0 // pred_check_branch
    %417 = sbr.rel (0) target = $region29
  $region28: #{basic_block_forward.6} parent=0 // pred_region
    _
  $region29: #{basic_block_forward.6} parent=0 // pred_fallthru
    _
  // Predicated region
  $region30: #{basic_block_forward.6} parent=0 // pred_check
    _
  $region31: #{basic_block_forward.6} parent=0 // pred_check_branch
    %419 = sbr.rel (0) target = $region33
  $region32: #{basic_block_forward.6} parent=0 // pred_region
    _
  $region33: #{basic_block_forward.6} parent=0 // pred_fallthru
    _

</llo_original>
